<compile_context>
chip_gen: v7x
topology: tpu7x:2x2x1
jax: 0.10.0
libtpu: 0.0.40
codegen_flags: <defaults>
</compile_context>

<pallas_src>
import functools
import math

import jax
import jax.numpy as jnp
from jax.experimental import pallas as pl
from jax.experimental.pallas import tpu as pltpu


# ----------------------------------------------------------------------------
# Rotary tables (GPT-NeoX convention), with the rotate-half sign and the
# query-side 1/sqrt(c) scale folded in (compile-time constants).
# ----------------------------------------------------------------------------
def rotary_cos_sin(seq_len, dim):
    inv_freq = 1.0 / (10000.0 ** (jnp.arange(0, dim, 2, dtype=jnp.float32) / dim))
    t = jnp.arange(seq_len, dtype=jnp.float32)
    freqs = jnp.einsum("i,j->ij", t, inv_freq)          # (S, dim/2)
    emb = jnp.concatenate([freqs, freqs], axis=-1)      # (S, dim)
    return jnp.cos(emb), jnp.sin(emb)


def folded_rope_tables(seq_len, dim):
    """(4, S, dim): [cos_q, sin_q, cos_k, sin_k] with the rotate-half sign folded
    into the sin rows and the 1/sqrt(dim) query scale folded into the q rows."""
    cos, sin = rotary_cos_sin(seq_len, dim)
    half = dim // 2
    sign = jnp.concatenate(
        [-jnp.ones((half,), jnp.float32), jnp.ones((half,), jnp.float32)])
    sin_signed = sin * sign
    q_scale = 1.0 / math.sqrt(dim)
    return jnp.stack([cos * q_scale, sin_signed * q_scale, cos, sin_signed])


# ----------------------------------------------------------------------------
# Pallas kernel: rotary + scaled dot-product attention for a head-packed block
# of gb batch elements per grid step.
# ----------------------------------------------------------------------------
def _mha_kernel(q_ref, k_ref, v_ref, tbl_ref, o_ref, *, n_head, c, rope_dtype):
    half = c // 2
    mm_dtype = q_ref.dtype                       # bf16 on the fast path

    # Head-packed, lane-dense blocks: (gb, S, N_head*c).
    qp = q_ref[...].astype(rope_dtype)
    kp = k_ref[...].astype(rope_dtype)
    vp = v_ref[...]                              # MXU operand only: storage dtype

    cq, sq = tbl_ref[0], tbl_ref[1]              # (S, c); sign + q-scale folded in
    ck, sk = tbl_ref[2], tbl_ref[3]

    def rotate(t):
        # Rotate-half sign already lives in the sin tables -> pure rotation here.
        if c % 128 == 0:
            return pltpu.roll(t, shift=half, axis=-1)   # lane-native: XLU roll
        # small head dims: slice+concat lowers reliably in Mosaic
        return jnp.concatenate([t[..., half:], t[..., :half]], axis=-1)

    outs = []
    for h in range(n_head):                      # static head split: lane slices
        lo = h * c
        qh = qp[..., lo:lo + c]
        kh = kp[..., lo:lo + c]
        vh = vp[..., lo:lo + c]

        qh = qh * cq + rotate(qh) * sq           # 1/sqrt(c) folded into cq / sq
        kh = kh * ck + rotate(kh) * sk

        # Batched QK^T over the gb batch elements (no explicit k.T).
        s = jnp.einsum("gqc,gkc->gqk", qh.astype(mm_dtype), kh.astype(mm_dtype),
                       preferred_element_type=jnp.float32)        # (gb, S, S) f32

        # Numerically stable softmax; keep p unnormalized and rescale the (S, c)
        # output rather than the (S, S) probabilities.
        m = jnp.max(s, axis=-1, keepdims=True)
        p = jnp.exp(s - m)
        denom = jnp.sum(p, axis=-1, keepdims=True)

        acc = jnp.einsum("gqk,gkc->gqc", p.astype(mm_dtype), vh,
                         preferred_element_type=jnp.float32)      # (gb, S, c) f32
        outs.append(acc * pl.reciprocal(denom, approx=True))      # EUP reciprocal

    # One lane-dense, unmasked store of the head-packed (gb, S, N_head*c) slab.
    o_ref[...] = jnp.concatenate(outs, axis=-1).astype(o_ref.dtype)


# ----------------------------------------------------------------------------
# Generation-aware sizing helpers.
# ----------------------------------------------------------------------------
def _vmem_capacity_bytes():
    try:
        return int(pltpu.get_tpu_info().vmem_capacity_bytes)
    except Exception:
        return 64 << 20                          # assume the tightest chip (v7x)


def _rope_dtype(compute_dtype):
    # v5e has no bf16 VPU/EUP -> keep the elementwise RoPE math in f32 there.
    try:
        kind = jax.devices()[0].device_kind.lower()
    except Exception:
        kind = ""
    if "v5 lite" in kind or "v5e" in kind or "v5litepod" in kind:
        return jnp.float32
    return compute_dtype


def _choose_batch_block(bflat, n_head, seq, c, in_isz, out_isz, rope_isz,
                        vmem_budget_bytes):
    """Largest per-step batch block whose full footprint (double-buffered DMA
    blocks + f32 scores/exp + f32 accumulators + packed output slab) fits the
    budget, while keeping enough grid steps for the DMA pipeline to hide HBM
    latency (and so both v7x TensorCores get work)."""
    hc = n_head * c

    def est_bytes(gb):
        io = 3 * gb * seq * hc * in_isz * 2          # q/k/v blocks, double-buffered
        io += gb * seq * hc * out_isz * 2            # output block, double-buffered
        tables = 4 * seq * c * rope_isz * 2
        rope = 3 * gb * seq * hc * max(rope_isz, in_isz)   # rope'd q/k + rotate temps
        scores = 4 * gb * seq * seq * 4              # s + exp(s) f32, ~2 heads live
        acc = 2 * gb * seq * hc * 4                  # f32 per-head outputs + concat
        return io + tables + rope + scores + acc

    min_steps = min(bflat, 4)        # ~4 steps lets double-buffering hide DMA
    best = 1
    for gb in range(1, bflat + 1):
        if bflat % gb != 0:
            continue
        if bflat // gb < min_steps:
            continue
        if est_bytes(gb) > vmem_budget_bytes:
            continue
        best = max(best, gb)
    return best, est_bytes(best)


def pallas_mha(q, k, v, *, n_head, c, compute_dtype=jnp.bfloat16):
    """q, k, v: head-packed (B_flat, S, N_head*c).
    Returns head-packed (B_flat, S, N_head*c) in compute_dtype."""
    bflat, seq, hc = q.shape
    assert hc == n_head * c and c % 2 == 0, "rotary embedding needs an even head dim"

    rope_dtype = _rope_dtype(compute_dtype)
    tables = folded_rope_tables(seq, c).astype(rope_dtype)        # (4, S, c)

    capacity = _vmem_capacity_bytes()
    gb, est = _choose_batch_block(
        bflat, n_head, seq, c,
        jnp.dtype(compute_dtype).itemsize, jnp.dtype(compute_dtype).itemsize,
        jnp.dtype(rope_dtype).itemsize,
        int(capacity * 0.45))
    grid = (bflat // gb,)
    # Scoped-VMEM limit derived from the per-step estimate + margin, never above
    # ~3/4 of the chip's physical VMEM (v7x: 64 MiB, v5e/v6e: 128 MiB).
    vmem_limit = int(min(capacity * 3 // 4, max(est + (16 << 20), 32 << 20)))

    kernel = functools.partial(_mha_kernel, n_head=n_head, c=c,
                               rope_dtype=rope_dtype)
    qkv_spec = pl.BlockSpec((gb, seq, hc), lambda b: (b, 0, 0))
    tbl_spec = pl.BlockSpec((4, seq, c), lambda b: (0, 0, 0))
    out_spec = pl.BlockSpec((gb, seq, hc), lambda b: (b, 0, 0))

    # TODO(synk): for long sequences switch to flash-style online-softmax tiling
    # over the key axis so the f32 (gb, S, S) scores never materialize; the
    # crossover is generation-specific (~S>=512 on v7x's 64 MiB VMEM, ~1-2K on
    # v5e/v6e's 128 MiB).
    return pl.pallas_call(
        kernel,
        out_shape=jax.ShapeDtypeStruct((bflat, seq, hc), compute_dtype),
        grid=grid,
        in_specs=[qkv_spec, qkv_spec, qkv_spec, tbl_spec],
        out_specs=out_spec,
        compiler_params=pltpu.CompilerParams(
            dimension_semantics=("parallel",),
            vmem_limit_bytes=vmem_limit,
        ),
    )(q, k, v, tables)


# ----------------------------------------------------------------------------
# MultiHeadAttention module (JAX + Pallas)
# ----------------------------------------------------------------------------
class MultiHeadAttentionPallas:
    def __init__(self, c_in, c, N_head, attn_dim, gated=False, is_global=False,
                 use_bias_for_embeddings=False, compute_dtype=jnp.bfloat16, key=None):
        # TODO(synk): is_global=True path (prepare_qkv_global) not implemented.
        assert not is_global
        self.c_in = c_in
        self.c = c
        self.N_head = N_head
        self.attn_dim = attn_dim
        self.gated = gated
        self.compute_dtype = compute_dtype

        keys = jax.random.split(key, 10)

        def init_linear(kw, kb, fan_in, fan_out, with_bias):
            scale = 1.0 / math.sqrt(fan_in)
            w = jax.random.uniform(kw, (fan_in, fan_out), jnp.float32, -scale, scale)
            b = (jax.random.uniform(kb, (fan_out,), jnp.float32, -scale, scale)
                 if with_bias else None)
            return w, b

        ch = c * N_head
        self.wq, self.bq = init_linear(keys[0], keys[1], c_in, ch, use_bias_for_embeddings)
        self.wk, self.bk = init_linear(keys[2], keys[3], c_in, ch, use_bias_for_embeddings)
        self.wv, self.bv = init_linear(keys[4], keys[5], c_in, ch, use_bias_for_embeddings)
        self.wo, self.bo = init_linear(keys[6], keys[7], ch, c_in, True)
        if gated:
            self.wg, self.bg = init_linear(keys[8], keys[9], c_in, ch, True)

    @staticmethod
    def _project(x, w, b):
        y = jnp.einsum("...i,io->...o", x, w)
        return y if b is None else y + b

    def __call__(self, x, bias=None, attention_mask=None):
        # TODO(synk): additive bias / attention_mask paths not wired into the kernel.
        assert bias is None and attention_mask is None

        x_m = jnp.moveaxis(x, self.attn_dim, -2)             # (..., S, c_in)
        lead = x_m.shape[:-2]
        S = x_m.shape[-2]
        hc = self.N_head * self.c

        # The projections already produce the head-packed (..., S, N_head*c)
        # layout the kernel consumes -> no wrapper-side head transposes at all.
        q = self._project(x_m, self.wq, self.bq)
        k = self._project(x_m, self.wk, self.bk)
        v = self._project(x_m, self.wv, self.bv)

        def flat(t):
            return t.reshape((-1, S, hc)).astype(self.compute_dtype)

        o = pallas_mha(flat(q), flat(k), flat(v), n_head=self.N_head, c=self.c,
                       compute_dtype=self.compute_dtype)
        o = o.reshape(lead + (S, hc)).astype(jnp.float32)     # bf16 writeback, f32 epilogue

        if self.gated:
            o = jax.nn.sigmoid(self._project(x_m, self.wg, self.bg)) * o
        out = self._project(o, self.wo, self.bo)
        return jnp.moveaxis(out, -2, self.attn_dim).astype(x.dtype)

    # Pure-JAX f32 reference (same math, standard RoPE) for validation.
    def reference(self, x):
        x_m = jnp.moveaxis(x, self.attn_dim, -2)
        q = self._project(x_m, self.wq, self.bq)
        k = self._project(x_m, self.wk, self.bk)
        v = self._project(x_m, self.wv, self.bv)

        def split(t):
            t = t.reshape(t.shape[:-1] + (self.N_head, self.c))
            return jnp.swapaxes(t, -2, -3)                   # (..., H, S, c)

        q, k, v = split(q), split(k), split(v)
        S = q.shape[-2]
        cos, sin = rotary_cos_sin(S, self.c)
        half = self.c // 2

        def rot_half(t):
            return jnp.concatenate([-t[..., half:], t[..., :half]], axis=-1)

        q = q * cos + rot_half(q) * sin
        k = k * cos + rot_half(k) * sin
        q = q / math.sqrt(self.c)
        a = jax.nn.softmax(jnp.einsum("...qc,...kc->...qk", q, k), axis=-1)
        o = jnp.einsum("...qk,...kc->...qc", a, v)
        o = jnp.swapaxes(o, -3, -2)
        o = o.reshape(o.shape[:-2] + (self.N_head * self.c,))
        if self.gated:
            o = jax.nn.sigmoid(self._project(x_m, self.wg, self.bg)) * o
        out = self._project(o, self.wo, self.bo)
        return jnp.moveaxis(out, -2, self.attn_dim)


if __name__ == "__main__":
    key = jax.random.PRNGKey(0)
    k_x, k_params = jax.random.split(key)

    # Evoformer-pair-stack-like shapes, small but TPU-friendly:
    # 4 heads x 32-channel heads pack to exactly 128 lanes in the kernel I/O.
    B, S, c_in = 2, 64, 128
    c, N_head = 32, 4

    x = jax.random.normal(k_x, (B, S, c_in), dtype=jnp.float32)

    mha = MultiHeadAttentionPallas(
        c_in=c_in, c=c, N_head=N_head, attn_dim=-2, gated=True, key=k_params
    )

    out = jax.block_until_ready(mha(x))
    assert out.shape == (B, S, c_in), out.shape

    ref = jax.block_until_ready(mha.reference(x))
    max_err = float(jnp.max(jnp.abs(out - ref)))
    # bf16 q/k/v + bf16 RoPE + bf16 writeback + approx reciprocal vs pure-f32 ref
    assert jnp.allclose(out, ref, atol=3e-2, rtol=3e-2), max_err

    print("KERNEL_OK")
</pallas_src>

<mosaic_0001>
module attributes {stable_mosaic.version = 11 : i64} {
  func.func @_mha_kernel(%arg0: i32, %arg1: memref<1x64x128xbf16, #tpu.memory_space<vmem>>, %arg2: memref<1x64x128xbf16, #tpu.memory_space<vmem>>, %arg3: memref<1x64x128xbf16, #tpu.memory_space<vmem>>, %arg4: memref<4x64x32xbf16, #tpu.memory_space<vmem>>, %arg5: memref<1x64x128xbf16, #tpu.memory_space<vmem>>) attributes {dimension_semantics = [#tpu.dimension_semantics<parallel>], iteration_bounds = array<i64: 2>, scalar_prefetch = 0 : i64, scratch_operands = 0 : i64, tpu.core_type = #tpu.core_type<tc>, window_params = [{transform_indices = @transform_0, window_bounds = array<i64: 1, 64, 128>}, {transform_indices = @transform_1, window_bounds = array<i64: 1, 64, 128>}, {transform_indices = @transform_2, window_bounds = array<i64: 1, 64, 128>}, {pipeline_mode = #tpu.pipeline_mode<synchronous>, transform_indices = @transform_3, window_bounds = array<i64: 4, 64, 32>}, {transform_indices = @transform_4, window_bounds = array<i64: 1, 64, 128>}]} {
    %c0 = arith.constant 0 : index
    %c0_0 = arith.constant 0 : index
    %c0_1 = arith.constant 0 : index
    %0 = vector.load %arg1[%c0, %c0_0, %c0_1] : memref<1x64x128xbf16, #tpu.memory_space<vmem>>, vector<1x64x128xbf16>
    %c0_2 = arith.constant 0 : index
    %c0_3 = arith.constant 0 : index
    %c0_4 = arith.constant 0 : index
    %1 = vector.load %arg2[%c0_2, %c0_3, %c0_4] : memref<1x64x128xbf16, #tpu.memory_space<vmem>>, vector<1x64x128xbf16>
    %c0_5 = arith.constant 0 : index
    %c0_6 = arith.constant 0 : index
    %c0_7 = arith.constant 0 : index
    %2 = vector.load %arg3[%c0_5, %c0_6, %c0_7] : memref<1x64x128xbf16, #tpu.memory_space<vmem>>, vector<1x64x128xbf16>
    %c0_8 = arith.constant 0 : index
    %c0_9 = arith.constant 0 : index
    %c0_10 = arith.constant 0 : index
    %3 = vector.load %arg4[%c0_8, %c0_9, %c0_10] : memref<4x64x32xbf16, #tpu.memory_space<vmem>>, vector<1x64x32xbf16>
    %4 = vector.shape_cast %3 : vector<1x64x32xbf16> to vector<64x32xbf16>
    %c1 = arith.constant 1 : index
    %c0_11 = arith.constant 0 : index
    %c0_12 = arith.constant 0 : index
    %5 = vector.load %arg4[%c1, %c0_11, %c0_12] : memref<4x64x32xbf16, #tpu.memory_space<vmem>>, vector<1x64x32xbf16>
    %6 = vector.shape_cast %5 : vector<1x64x32xbf16> to vector<64x32xbf16>
    %c2 = arith.constant 2 : index
    %c0_13 = arith.constant 0 : index
    %c0_14 = arith.constant 0 : index
    %7 = vector.load %arg4[%c2, %c0_13, %c0_14] : memref<4x64x32xbf16, #tpu.memory_space<vmem>>, vector<1x64x32xbf16>
    %8 = vector.shape_cast %7 : vector<1x64x32xbf16> to vector<64x32xbf16>
    %c3 = arith.constant 3 : index
    %c0_15 = arith.constant 0 : index
    %c0_16 = arith.constant 0 : index
    %9 = vector.load %arg4[%c3, %c0_15, %c0_16] : memref<4x64x32xbf16, #tpu.memory_space<vmem>>, vector<1x64x32xbf16>
    %10 = vector.shape_cast %9 : vector<1x64x32xbf16> to vector<64x32xbf16>
    %11 = vector.extract_strided_slice %0 {offsets = [0, 0, 0], sizes = [1, 64, 32], strides = [1, 1, 1]} : vector<1x64x128xbf16> to vector<1x64x32xbf16>
    %12 = vector.extract_strided_slice %1 {offsets = [0, 0, 0], sizes = [1, 64, 32], strides = [1, 1, 1]} : vector<1x64x128xbf16> to vector<1x64x32xbf16>
    %13 = vector.extract_strided_slice %2 {offsets = [0, 0, 0], sizes = [1, 64, 32], strides = [1, 1, 1]} : vector<1x64x128xbf16> to vector<1x64x32xbf16>
    %14 = vector.shape_cast %4 : vector<64x32xbf16> to vector<1x64x32xbf16>
    %15 = arith.mulf %11, %14 : vector<1x64x32xbf16>
    %16 = vector.extract_strided_slice %11 {offsets = [0, 0, 16], sizes = [1, 64, 16], strides = [1, 1, 1]} : vector<1x64x32xbf16> to vector<1x64x16xbf16>
    %17 = vector.extract_strided_slice %11 {offsets = [0, 0, 0], sizes = [1, 64, 16], strides = [1, 1, 1]} : vector<1x64x32xbf16> to vector<1x64x16xbf16>
    %18 = tpu.concatenate %16, %17 in 2 : vector<1x64x16xbf16>, vector<1x64x16xbf16> -> vector<1x64x32xbf16>
    %19 = vector.shape_cast %6 : vector<64x32xbf16> to vector<1x64x32xbf16>
    %20 = arith.mulf %18, %19 : vector<1x64x32xbf16>
    %21 = arith.addf %15, %20 : vector<1x64x32xbf16>
    %22 = vector.shape_cast %8 : vector<64x32xbf16> to vector<1x64x32xbf16>
    %23 = arith.mulf %12, %22 : vector<1x64x32xbf16>
    %24 = vector.extract_strided_slice %12 {offsets = [0, 0, 16], sizes = [1, 64, 16], strides = [1, 1, 1]} : vector<1x64x32xbf16> to vector<1x64x16xbf16>
    %25 = vector.extract_strided_slice %12 {offsets = [0, 0, 0], sizes = [1, 64, 16], strides = [1, 1, 1]} : vector<1x64x32xbf16> to vector<1x64x16xbf16>
    %26 = tpu.concatenate %24, %25 in 2 : vector<1x64x16xbf16>, vector<1x64x16xbf16> -> vector<1x64x32xbf16>
    %27 = vector.shape_cast %10 : vector<64x32xbf16> to vector<1x64x32xbf16>
    %28 = arith.mulf %26, %27 : vector<1x64x32xbf16>
    %29 = arith.addf %23, %28 : vector<1x64x32xbf16>
    "tpu.trace_start"() <{level = 10 : i32, message = "gqc,gkc->gqk"}> : () -> ()
    %cst = arith.constant dense<0.000000e+00> : vector<1x64x64xf32>
    %30 = tpu.matmul %21, %29, %cst {dimension_numbers = #tpu.dot_dimension_numbers<[2], [2], [1], [1], [0, 0, 0, 1, 1, 1], [0], [0]>} : vector<1x64x32xbf16>, vector<1x64x32xbf16>, vector<1x64x64xf32> -> vector<1x64x64xf32>
    "tpu.trace_stop"() : () -> ()
    %cst_17 = arith.constant dense<0xFF800000> : vector<1x64xf32>
    %31 = vector.multi_reduction <maximumf>, %30, %cst_17 [2] : vector<1x64x64xf32> to vector<1x64xf32>
    %32 = vector.shape_cast %31 : vector<1x64xf32> to vector<1x64x1xf32>
    %33 = vector.broadcast %32 : vector<1x64x1xf32> to vector<1x64x64xf32>
    %34 = arith.subf %30, %33 : vector<1x64x64xf32>
    %35 = math.exp %34 : vector<1x64x64xf32>
    %cst_18 = arith.constant dense<0.000000e+00> : vector<1x64xf32>
    %36 = vector.multi_reduction <add>, %35, %cst_18 [2] : vector<1x64x64xf32> to vector<1x64xf32>
    %37 = vector.shape_cast %36 : vector<1x64xf32> to vector<1x64x1xf32>
    %38 = arith.truncf %35 : vector<1x64x64xf32> to vector<1x64x64xbf16>
    "tpu.trace_start"() <{level = 10 : i32, message = "gqk,gkc->gqc"}> : () -> ()
    %cst_19 = arith.constant dense<0.000000e+00> : vector<1x64x32xf32>
    %39 = tpu.matmul %38, %13, %cst_19 {dimension_numbers = #tpu.dot_dimension_numbers<[2], [1], [1], [2], [0, 0, 0, 1, 1, 2], [0], [0]>} : vector<1x64x64xbf16>, vector<1x64x32xbf16>, vector<1x64x32xf32> -> vector<1x64x32xf32>
    "tpu.trace_stop"() : () -> ()
    %40 = tpu.reciprocal %37 {approx = true} : vector<1x64x1xf32> -> vector<1x64x1xf32>
    %41 = vector.broadcast %40 : vector<1x64x1xf32> to vector<1x64x32xf32>
    %42 = arith.mulf %39, %41 : vector<1x64x32xf32>
    %43 = vector.extract_strided_slice %0 {offsets = [0, 0, 32], sizes = [1, 64, 32], strides = [1, 1, 1]} : vector<1x64x128xbf16> to vector<1x64x32xbf16>
    %44 = vector.extract_strided_slice %1 {offsets = [0, 0, 32], sizes = [1, 64, 32], strides = [1, 1, 1]} : vector<1x64x128xbf16> to vector<1x64x32xbf16>
    %45 = vector.extract_strided_slice %2 {offsets = [0, 0, 32], sizes = [1, 64, 32], strides = [1, 1, 1]} : vector<1x64x128xbf16> to vector<1x64x32xbf16>
    %46 = vector.shape_cast %4 : vector<64x32xbf16> to vector<1x64x32xbf16>
    %47 = arith.mulf %43, %46 : vector<1x64x32xbf16>
    %48 = vector.extract_strided_slice %43 {offsets = [0, 0, 16], sizes = [1, 64, 16], strides = [1, 1, 1]} : vector<1x64x32xbf16> to vector<1x64x16xbf16>
    %49 = vector.extract_strided_slice %43 {offsets = [0, 0, 0], sizes = [1, 64, 16], strides = [1, 1, 1]} : vector<1x64x32xbf16> to vector<1x64x16xbf16>
    %50 = tpu.concatenate %48, %49 in 2 : vector<1x64x16xbf16>, vector<1x64x16xbf16> -> vector<1x64x32xbf16>
    %51 = vector.shape_cast %6 : vector<64x32xbf16> to vector<1x64x32xbf16>
    %52 = arith.mulf %50, %51 : vector<1x64x32xbf16>
    %53 = arith.addf %47, %52 : vector<1x64x32xbf16>
    %54 = vector.shape_cast %8 : vector<64x32xbf16> to vector<1x64x32xbf16>
    %55 = arith.mulf %44, %54 : vector<1x64x32xbf16>
    %56 = vector.extract_strided_slice %44 {offsets = [0, 0, 16], sizes = [1, 64, 16], strides = [1, 1, 1]} : vector<1x64x32xbf16> to vector<1x64x16xbf16>
    %57 = vector.extract_strided_slice %44 {offsets = [0, 0, 0], sizes = [1, 64, 16], strides = [1, 1, 1]} : vector<1x64x32xbf16> to vector<1x64x16xbf16>
    %58 = tpu.concatenate %56, %57 in 2 : vector<1x64x16xbf16>, vector<1x64x16xbf16> -> vector<1x64x32xbf16>
    %59 = vector.shape_cast %10 : vector<64x32xbf16> to vector<1x64x32xbf16>
    %60 = arith.mulf %58, %59 : vector<1x64x32xbf16>
    %61 = arith.addf %55, %60 : vector<1x64x32xbf16>
    "tpu.trace_start"() <{level = 10 : i32, message = "gqc,gkc->gqk"}> : () -> ()
    %cst_20 = arith.constant dense<0.000000e+00> : vector<1x64x64xf32>
    %62 = tpu.matmul %53, %61, %cst_20 {dimension_numbers = #tpu.dot_dimension_numbers<[2], [2], [1], [1], [0, 0, 0, 1, 1, 1], [0], [0]>} : vector<1x64x32xbf16>, vector<1x64x32xbf16>, vector<1x64x64xf32> -> vector<1x64x64xf32>
    "tpu.trace_stop"() : () -> ()
    %cst_21 = arith.constant dense<0xFF800000> : vector<1x64xf32>
    %63 = vector.multi_reduction <maximumf>, %62, %cst_21 [2] : vector<1x64x64xf32> to vector<1x64xf32>
    %64 = vector.shape_cast %63 : vector<1x64xf32> to vector<1x64x1xf32>
    %65 = vector.broadcast %64 : vector<1x64x1xf32> to vector<1x64x64xf32>
    %66 = arith.subf %62, %65 : vector<1x64x64xf32>
    %67 = math.exp %66 : vector<1x64x64xf32>
    %cst_22 = arith.constant dense<0.000000e+00> : vector<1x64xf32>
    %68 = vector.multi_reduction <add>, %67, %cst_22 [2] : vector<1x64x64xf32> to vector<1x64xf32>
    %69 = vector.shape_cast %68 : vector<1x64xf32> to vector<1x64x1xf32>
    %70 = arith.truncf %67 : vector<1x64x64xf32> to vector<1x64x64xbf16>
    "tpu.trace_start"() <{level = 10 : i32, message = "gqk,gkc->gqc"}> : () -> ()
    %cst_23 = arith.constant dense<0.000000e+00> : vector<1x64x32xf32>
    %71 = tpu.matmul %70, %45, %cst_23 {dimension_numbers = #tpu.dot_dimension_numbers<[2], [1], [1], [2], [0, 0, 0, 1, 1, 2], [0], [0]>} : vector<1x64x64xbf16>, vector<1x64x32xbf16>, vector<1x64x32xf32> -> vector<1x64x32xf32>
    "tpu.trace_stop"() : () -> ()
    %72 = tpu.reciprocal %69 {approx = true} : vector<1x64x1xf32> -> vector<1x64x1xf32>
    %73 = vector.broadcast %72 : vector<1x64x1xf32> to vector<1x64x32xf32>
    %74 = arith.mulf %71, %73 : vector<1x64x32xf32>
    %75 = vector.extract_strided_slice %0 {offsets = [0, 0, 64], sizes = [1, 64, 32], strides = [1, 1, 1]} : vector<1x64x128xbf16> to vector<1x64x32xbf16>
    %76 = vector.extract_strided_slice %1 {offsets = [0, 0, 64], sizes = [1, 64, 32], strides = [1, 1, 1]} : vector<1x64x128xbf16> to vector<1x64x32xbf16>
    %77 = vector.extract_strided_slice %2 {offsets = [0, 0, 64], sizes = [1, 64, 32], strides = [1, 1, 1]} : vector<1x64x128xbf16> to vector<1x64x32xbf16>
    %78 = vector.shape_cast %4 : vector<64x32xbf16> to vector<1x64x32xbf16>
    %79 = arith.mulf %75, %78 : vector<1x64x32xbf16>
    %80 = vector.extract_strided_slice %75 {offsets = [0, 0, 16], sizes = [1, 64, 16], strides = [1, 1, 1]} : vector<1x64x32xbf16> to vector<1x64x16xbf16>
    %81 = vector.extract_strided_slice %75 {offsets = [0, 0, 0], sizes = [1, 64, 16], strides = [1, 1, 1]} : vector<1x64x32xbf16> to vector<1x64x16xbf16>
    %82 = tpu.concatenate %80, %81 in 2 : vector<1x64x16xbf16>, vector<1x64x16xbf16> -> vector<1x64x32xbf16>
    %83 = vector.shape_cast %6 : vector<64x32xbf16> to vector<1x64x32xbf16>
    %84 = arith.mulf %82, %83 : vector<1x64x32xbf16>
    %85 = arith.addf %79, %84 : vector<1x64x32xbf16>
    %86 = vector.shape_cast %8 : vector<64x32xbf16> to vector<1x64x32xbf16>
    %87 = arith.mulf %76, %86 : vector<1x64x32xbf16>
    %88 = vector.extract_strided_slice %76 {offsets = [0, 0, 16], sizes = [1, 64, 16], strides = [1, 1, 1]} : vector<1x64x32xbf16> to vector<1x64x16xbf16>
    %89 = vector.extract_strided_slice %76 {offsets = [0, 0, 0], sizes = [1, 64, 16], strides = [1, 1, 1]} : vector<1x64x32xbf16> to vector<1x64x16xbf16>
    %90 = tpu.concatenate %88, %89 in 2 : vector<1x64x16xbf16>, vector<1x64x16xbf16> -> vector<1x64x32xbf16>
    %91 = vector.shape_cast %10 : vector<64x32xbf16> to vector<1x64x32xbf16>
    %92 = arith.mulf %90, %91 : vector<1x64x32xbf16>
    %93 = arith.addf %87, %92 : vector<1x64x32xbf16>
    "tpu.trace_start"() <{level = 10 : i32, message = "gqc,gkc->gqk"}> : () -> ()
    %cst_24 = arith.constant dense<0.000000e+00> : vector<1x64x64xf32>
    %94 = tpu.matmul %85, %93, %cst_24 {dimension_numbers = #tpu.dot_dimension_numbers<[2], [2], [1], [1], [0, 0, 0, 1, 1, 1], [0], [0]>} : vector<1x64x32xbf16>, vector<1x64x32xbf16>, vector<1x64x64xf32> -> vector<1x64x64xf32>
    "tpu.trace_stop"() : () -> ()
    %cst_25 = arith.constant dense<0xFF800000> : vector<1x64xf32>
    %95 = vector.multi_reduction <maximumf>, %94, %cst_25 [2] : vector<1x64x64xf32> to vector<1x64xf32>
    %96 = vector.shape_cast %95 : vector<1x64xf32> to vector<1x64x1xf32>
    %97 = vector.broadcast %96 : vector<1x64x1xf32> to vector<1x64x64xf32>
    %98 = arith.subf %94, %97 : vector<1x64x64xf32>
    %99 = math.exp %98 : vector<1x64x64xf32>
    %cst_26 = arith.constant dense<0.000000e+00> : vector<1x64xf32>
    %100 = vector.multi_reduction <add>, %99, %cst_26 [2] : vector<1x64x64xf32> to vector<1x64xf32>
    %101 = vector.shape_cast %100 : vector<1x64xf32> to vector<1x64x1xf32>
    %102 = arith.truncf %99 : vector<1x64x64xf32> to vector<1x64x64xbf16>
    "tpu.trace_start"() <{level = 10 : i32, message = "gqk,gkc->gqc"}> : () -> ()
    %cst_27 = arith.constant dense<0.000000e+00> : vector<1x64x32xf32>
    %103 = tpu.matmul %102, %77, %cst_27 {dimension_numbers = #tpu.dot_dimension_numbers<[2], [1], [1], [2], [0, 0, 0, 1, 1, 2], [0], [0]>} : vector<1x64x64xbf16>, vector<1x64x32xbf16>, vector<1x64x32xf32> -> vector<1x64x32xf32>
    "tpu.trace_stop"() : () -> ()
    %104 = tpu.reciprocal %101 {approx = true} : vector<1x64x1xf32> -> vector<1x64x1xf32>
    %105 = vector.broadcast %104 : vector<1x64x1xf32> to vector<1x64x32xf32>
    %106 = arith.mulf %103, %105 : vector<1x64x32xf32>
    %107 = vector.extract_strided_slice %0 {offsets = [0, 0, 96], sizes = [1, 64, 32], strides = [1, 1, 1]} : vector<1x64x128xbf16> to vector<1x64x32xbf16>
    %108 = vector.extract_strided_slice %1 {offsets = [0, 0, 96], sizes = [1, 64, 32], strides = [1, 1, 1]} : vector<1x64x128xbf16> to vector<1x64x32xbf16>
    %109 = vector.extract_strided_slice %2 {offsets = [0, 0, 96], sizes = [1, 64, 32], strides = [1, 1, 1]} : vector<1x64x128xbf16> to vector<1x64x32xbf16>
    %110 = vector.shape_cast %4 : vector<64x32xbf16> to vector<1x64x32xbf16>
    %111 = arith.mulf %107, %110 : vector<1x64x32xbf16>
    %112 = vector.extract_strided_slice %107 {offsets = [0, 0, 16], sizes = [1, 64, 16], strides = [1, 1, 1]} : vector<1x64x32xbf16> to vector<1x64x16xbf16>
    %113 = vector.extract_strided_slice %107 {offsets = [0, 0, 0], sizes = [1, 64, 16], strides = [1, 1, 1]} : vector<1x64x32xbf16> to vector<1x64x16xbf16>
    %114 = tpu.concatenate %112, %113 in 2 : vector<1x64x16xbf16>, vector<1x64x16xbf16> -> vector<1x64x32xbf16>
    %115 = vector.shape_cast %6 : vector<64x32xbf16> to vector<1x64x32xbf16>
    %116 = arith.mulf %114, %115 : vector<1x64x32xbf16>
    %117 = arith.addf %111, %116 : vector<1x64x32xbf16>
    %118 = vector.shape_cast %8 : vector<64x32xbf16> to vector<1x64x32xbf16>
    %119 = arith.mulf %108, %118 : vector<1x64x32xbf16>
    %120 = vector.extract_strided_slice %108 {offsets = [0, 0, 16], sizes = [1, 64, 16], strides = [1, 1, 1]} : vector<1x64x32xbf16> to vector<1x64x16xbf16>
    %121 = vector.extract_strided_slice %108 {offsets = [0, 0, 0], sizes = [1, 64, 16], strides = [1, 1, 1]} : vector<1x64x32xbf16> to vector<1x64x16xbf16>
    %122 = tpu.concatenate %120, %121 in 2 : vector<1x64x16xbf16>, vector<1x64x16xbf16> -> vector<1x64x32xbf16>
    %123 = vector.shape_cast %10 : vector<64x32xbf16> to vector<1x64x32xbf16>
    %124 = arith.mulf %122, %123 : vector<1x64x32xbf16>
    %125 = arith.addf %119, %124 : vector<1x64x32xbf16>
    "tpu.trace_start"() <{level = 10 : i32, message = "gqc,gkc->gqk"}> : () -> ()
    %cst_28 = arith.constant dense<0.000000e+00> : vector<1x64x64xf32>
    %126 = tpu.matmul %117, %125, %cst_28 {dimension_numbers = #tpu.dot_dimension_numbers<[2], [2], [1], [1], [0, 0, 0, 1, 1, 1], [0], [0]>} : vector<1x64x32xbf16>, vector<1x64x32xbf16>, vector<1x64x64xf32> -> vector<1x64x64xf32>
    "tpu.trace_stop"() : () -> ()
    %cst_29 = arith.constant dense<0xFF800000> : vector<1x64xf32>
    %127 = vector.multi_reduction <maximumf>, %126, %cst_29 [2] : vector<1x64x64xf32> to vector<1x64xf32>
    %128 = vector.shape_cast %127 : vector<1x64xf32> to vector<1x64x1xf32>
    %129 = vector.broadcast %128 : vector<1x64x1xf32> to vector<1x64x64xf32>
    %130 = arith.subf %126, %129 : vector<1x64x64xf32>
    %131 = math.exp %130 : vector<1x64x64xf32>
    %cst_30 = arith.constant dense<0.000000e+00> : vector<1x64xf32>
    %132 = vector.multi_reduction <add>, %131, %cst_30 [2] : vector<1x64x64xf32> to vector<1x64xf32>
    %133 = vector.shape_cast %132 : vector<1x64xf32> to vector<1x64x1xf32>
    %134 = arith.truncf %131 : vector<1x64x64xf32> to vector<1x64x64xbf16>
    "tpu.trace_start"() <{level = 10 : i32, message = "gqk,gkc->gqc"}> : () -> ()
    %cst_31 = arith.constant dense<0.000000e+00> : vector<1x64x32xf32>
    %135 = tpu.matmul %134, %109, %cst_31 {dimension_numbers = #tpu.dot_dimension_numbers<[2], [1], [1], [2], [0, 0, 0, 1, 1, 2], [0], [0]>} : vector<1x64x64xbf16>, vector<1x64x32xbf16>, vector<1x64x32xf32> -> vector<1x64x32xf32>
    "tpu.trace_stop"() : () -> ()
    %136 = tpu.reciprocal %133 {approx = true} : vector<1x64x1xf32> -> vector<1x64x1xf32>
    %137 = vector.broadcast %136 : vector<1x64x1xf32> to vector<1x64x32xf32>
    %138 = arith.mulf %135, %137 : vector<1x64x32xf32>
    %139 = tpu.concatenate %42, %74, %106, %138 in 2 : vector<1x64x32xf32>, vector<1x64x32xf32>, vector<1x64x32xf32>, vector<1x64x32xf32> -> vector<1x64x128xf32>
    %140 = arith.truncf %139 : vector<1x64x128xf32> to vector<1x64x128xbf16>
    %c0_32 = arith.constant 0 : index
    %c0_33 = arith.constant 0 : index
    %c0_34 = arith.constant 0 : index
    %141 = vector.load %arg5[%c0_32, %c0_33, %c0_34] : memref<1x64x128xbf16, #tpu.memory_space<vmem>>, vector<1x64x128xbf16>
    tpu.vector_store %arg5[%c0_32, %c0_33, %c0_34], %140 {strides = array<i32>} : memref<1x64x128xbf16, #tpu.memory_space<vmem>>, vector<1x64x128xbf16>,
    return
  }
  func.func @transform_0(%arg0: i32) -> (i32, i32, i32) {
    %c0_i32 = arith.constant 0 : i32
    %c0_i32_0 = arith.constant 0 : i32
    %c0_i32_1 = arith.constant 0 : i32
    return %arg0, %c0_i32, %c0_i32_0 : i32, i32, i32
  }
  func.func @transform_1(%arg0: i32) -> (i32, i32, i32) {
    %c0_i32 = arith.constant 0 : i32
    %c0_i32_0 = arith.constant 0 : i32
    %c0_i32_1 = arith.constant 0 : i32
    return %arg0, %c0_i32, %c0_i32_0 : i32, i32, i32
  }
  func.func @transform_2(%arg0: i32) -> (i32, i32, i32) {
    %c0_i32 = arith.constant 0 : i32
    %c0_i32_0 = arith.constant 0 : i32
    %c0_i32_1 = arith.constant 0 : i32
    return %arg0, %c0_i32, %c0_i32_0 : i32, i32, i32
  }
  func.func @transform_3(%arg0: i32) -> (i32, i32, i32) {
    %c0_i32 = arith.constant 0 : i32
    %c0_i32_0 = arith.constant 0 : i32
    %c0_i32_1 = arith.constant 0 : i32
    %c0_i32_2 = arith.constant 0 : i32
    return %c0_i32, %c0_i32_0, %c0_i32_1 : i32, i32, i32
  }
  func.func @transform_4(%arg0: i32) -> (i32, i32, i32) {
    %c0_i32 = arith.constant 0 : i32
    %c0_i32_0 = arith.constant 0 : i32
    %c0_i32_1 = arith.constant 0 : i32
    return %arg0, %c0_i32, %c0_i32_0 : i32, i32, i32
  }
}

</mosaic_0001>

<llo_original>
// kernel: tpu_custom_call.1
$region0: #{tpu_custom_call.1}
  #allocation0 [shape = 'u32[]', space=smem, size = 0x4, offset = 0x4, fixed_abs, tag = 'smem constant byte address 0x4 - core index']
  #allocation1 [shape = 'u32[144,128]{1,0:T(1,128)}', space=vmem, size = 0x12000, scoped, tag = 'internal scratch']
  %s0 = inlined_call_operand.vmem [shape: bf16[2,64,128], index: 0, kind: input, shape index: {}]
  %s1 = inlined_call_operand.vmem [shape: bf16[2,64,128], index: 1, kind: input, shape index: {}]
  %s2 = inlined_call_operand.vmem [shape: bf16[2,64,128], index: 2, kind: input, shape index: {}]
  %s3 = inlined_call_operand.vmem [shape: bf16[4,64,32], index: 3, kind: input, shape index: {}]
  %s4 = inlined_call_operand.hbm [shape: bf16[2,64,128], index: 4, kind: output, shape index: {}]
  %s5 = sld [smem:[#allocation0]]
  $region49: #{tpu_custom_call.1} parent=0
    _
  %s7 = ssub.s32 1, %s5
  %s8 = scalar_select 0, %s7, %s5
  $region1: #{tpu_custom_call.1} parent=0
    #allocation2 [shape = 'u8[32768]{0}', space=vmem, size = 0x8000, scoped, tag = 'output window, operand 0']
    #allocation3 [shape = 's32[2]{0}', space=sflag, size = 0x8, scoped, tag = 'scoped memory for tpu_custom_call.1']
    %9 = vsyncpa [#allocation3], 0
    %s10 = scalar_lea.sflag [#allocation3], 1
    %11 = vsyncpa %s10, 0
    loop: start=0, step=1, limit=4
    $region2: #{tpu_custom_call.1} parent=1 // loop_pre_header
      _
    $region3: #{tpu_custom_call.1} parent=1 // loop_header
      %s13 = sphi 0, %s17
      %p14 = scmp.ge.s32.totalorder %s13, 4
      %s23 = sphi 0, %s25
      %s26 = sphi 0, %s23
      %s27 = sphi 0, %s26
      %s43 = sphi 0, %s27
      %s49 = sphi 0, %s51
      %s52 = sphi 0, %s49
      %s53 = sphi 0, %s52
      %s69 = sphi 0, %s53
      %s75 = sphi 0, %s77
      %s78 = sphi 0, %s75
      %s79 = sphi 0, %s78
      %s95 = sphi 0, %s79
      %s99 = sphi 0, %s99
      %s101 = sphi 0, %s99
      %s102 = sphi 0, %s101
      %s116 = sphi 0, %s102
      %s122 = sphi 0, %s124
      %s125 = sphi 0, %s122
      %s126 = sphi 0, %s125
      %s142 = sphi 0, %s126
    $region4: #{tpu_custom_call.1} parent=1 // loop_header_branch
      %16 = sbr.rel (%p14) target = $region8
    $region5: #{tpu_custom_call.1} parent=1 // loop_body
      %s18 = ssub.s32 %s13, 1
      %s19 = ssub.s32 %s13, 2
      %s20 = sadd.s32 %s13, 1
      %s21 = ssub.s32 %s13, %s20
      %p22 = scmp.eq.s32.totalorder %s21, 0
      %s24 = sadd.s32 %s23, 1
      %s25 = scalar_select %p22, %s23, %s24
      %p28 = pneg %p22
      %p29 = scmp.eq.s32.totalorder %s13, 1
      %p30 = por %p28, %p29
      %p31 = scmp.ne.s32.totalorder %s23, %s26
      %p32 = scmp.eq.s32.totalorder %s13, 0
      %p33 = por %p31, %p32
      %p34 = scmp.ne.s32.totalorder %s23, %s26
      %p35 = scmp.eq.s32.totalorder %s18, 1
      %p36 = por %p34, %p35
      %p37 = scmp.ne.s32.totalorder %s26, %s27
      %p38 = scmp.eq.s32.totalorder %s18, 0
      %p39 = por %p37, %p38
      %p40 = scmp.ne.s32.totalorder %s26, %s27
      %p41 = scmp.eq.s32.totalorder %s19, 1
      %p42 = por %p40, %p41
      %p44 = scmp.ne.s32.totalorder %s27, %s43
      %p45 = scmp.eq.s32.totalorder %s19, 0
      %p46 = por %p44, %p45
      %s47 = ssub.s32 %s13, %s20
      %p48 = scmp.eq.s32.totalorder %s47, 0
      %s50 = sadd.s32 %s49, 1
      %s51 = scalar_select %p48, %s49, %s50
      %p54 = pneg %p48
      %p55 = scmp.eq.s32.totalorder %s13, 1
      %p56 = por %p54, %p55
      %p57 = scmp.ne.s32.totalorder %s49, %s52
      %p58 = scmp.eq.s32.totalorder %s13, 0
      %p59 = por %p57, %p58
      %p60 = scmp.ne.s32.totalorder %s49, %s52
      %p61 = scmp.eq.s32.totalorder %s18, 1
      %p62 = por %p60, %p61
      %p63 = scmp.ne.s32.totalorder %s52, %s53
      %p64 = scmp.eq.s32.totalorder %s18, 0
      %p65 = por %p63, %p64
      %p66 = scmp.ne.s32.totalorder %s52, %s53
      %p67 = scmp.eq.s32.totalorder %s19, 1
      %p68 = por %p66, %p67
      %p70 = scmp.ne.s32.totalorder %s53, %s69
      %p71 = scmp.eq.s32.totalorder %s19, 0
      %p72 = por %p70, %p71
      %s73 = ssub.s32 %s13, %s20
      %p74 = scmp.eq.s32.totalorder %s73, 0
      %s76 = sadd.s32 %s75, 1
      %s77 = scalar_select %p74, %s75, %s76
      %p80 = pneg %p74
      %p81 = scmp.eq.s32.totalorder %s13, 1
      %p82 = por %p80, %p81
      %p83 = scmp.ne.s32.totalorder %s75, %s78
      %p84 = scmp.eq.s32.totalorder %s13, 0
      %p85 = por %p83, %p84
      %p86 = scmp.ne.s32.totalorder %s75, %s78
      %p87 = scmp.eq.s32.totalorder %s18, 1
      %p88 = por %p86, %p87
      %p89 = scmp.ne.s32.totalorder %s78, %s79
      %p90 = scmp.eq.s32.totalorder %s18, 0
      %p91 = por %p89, %p90
      %p92 = scmp.ne.s32.totalorder %s78, %s79
      %p93 = scmp.eq.s32.totalorder %s19, 1
      %p94 = por %p92, %p93
      %p96 = scmp.ne.s32.totalorder %s79, %s95
      %p97 = scmp.eq.s32.totalorder %s19, 0
      %p98 = por %p96, %p97
      %s100 = sadd.s32 %s99, 1
      %p103 = scmp.eq.s32.totalorder %s13, 1
      %p104 = scmp.ne.s32.totalorder %s99, %s101
      %p105 = scmp.eq.s32.totalorder %s13, 0
      %p106 = por %p104, %p105
      %p107 = scmp.ne.s32.totalorder %s99, %s101
      %p108 = scmp.eq.s32.totalorder %s18, 1
      %p109 = por %p107, %p108
      %p110 = scmp.ne.s32.totalorder %s101, %s102
      %p111 = scmp.eq.s32.totalorder %s18, 0
      %p112 = por %p110, %p111
      %p113 = scmp.ne.s32.totalorder %s101, %s102
      %p114 = scmp.eq.s32.totalorder %s19, 1
      %p115 = por %p113, %p114
      %p117 = scmp.ne.s32.totalorder %s102, %s116
      %p118 = scmp.eq.s32.totalorder %s19, 0
      %p119 = por %p117, %p118
      %s120 = ssub.s32 %s13, %s20
      %p121 = scmp.eq.s32.totalorder %s120, 0
      %s123 = sadd.s32 %s122, 1
      %s124 = scalar_select %p121, %s122, %s123
      %p127 = pneg %p121
      %p128 = scmp.eq.s32.totalorder %s13, 1
      %p129 = por %p127, %p128
      %p130 = scmp.ne.s32.totalorder %s122, %s125
      %p131 = scmp.eq.s32.totalorder %s13, 0
      %p132 = por %p130, %p131
      %p133 = scmp.ne.s32.totalorder %s122, %s125
      %p134 = scmp.eq.s32.totalorder %s18, 1
      %p135 = por %p133, %p134
      %p136 = scmp.ne.s32.totalorder %s125, %s126
      %p137 = scmp.eq.s32.totalorder %s18, 0
      %p138 = por %p136, %p137
      %p139 = scmp.ne.s32.totalorder %s125, %s126
      %p140 = scmp.eq.s32.totalorder %s19, 1
      %p141 = por %p139, %p140
      %p143 = scmp.ne.s32.totalorder %s126, %s142
      %p144 = scmp.eq.s32.totalorder %s19, 0
      %p145 = por %p143, %p144
      %p146 = scmp.le.s32.totalorder 1, %s13
      %p147 = scmp.lt.s32.totalorder %s13, 3
      %p148 = pnand %p146, %p147
      %p149 = pneg %p148
      // Predicated region
      $region9: #{tpu_custom_call.1} parent=5 // pred_check
        _
      $region10: #{tpu_custom_call.1} parent=5 // pred_check_branch
        %151 = sbr.rel (%p148) target = $region12
      $region11: #{tpu_custom_call.1} parent=5 // pred_region
        %s152 = ssub.s32 %s13, 1
        // Predicated region
        $region13: #{tpu_custom_call.1} parent=11 // pred_check
          %p153 = pneg %p112
        $region14: #{tpu_custom_call.1} parent=11 // pred_check_branch
          %155 = sbr.rel (%p153) target = $region16
        $region15: #{tpu_custom_call.1} parent=11 // pred_region
          _
        $region16: #{tpu_custom_call.1} parent=11 // pred_fallthru
          _
      $region12: #{tpu_custom_call.1} parent=5 // pred_fallthru
        _
      %p156 = scmp.lt.s32.totalorder %s13, 2
      // Predicated region
      $region17: #{tpu_custom_call.1} parent=5 // pred_check
        %p157 = pneg %p156
      $region18: #{tpu_custom_call.1} parent=5 // pred_check_branch
        %159 = sbr.rel (%p157) target = $region20
      $region19: #{tpu_custom_call.1} parent=5 // pred_region
        // Predicated region
        $region21: #{tpu_custom_call.1} parent=19 // pred_check
          %p160 = pneg %p33
        $region22: #{tpu_custom_call.1} parent=19 // pred_check_branch
          %162 = sbr.rel (%p160) target = $region24
        $region23: #{tpu_custom_call.1} parent=19 // pred_region
          %p163 = scmp.lt.s32.totalorder %s13, 1
          %s164 = scalar_select %p163, %s13, 1
          %s165 = smul.addr %s164, 8
          %s166 = smul.addr %s165, 4
          %s167 = scalar_lea.vmem %s0, %s166
        $region24: #{tpu_custom_call.1} parent=19 // pred_fallthru
          _
        // Predicated region
        $region25: #{tpu_custom_call.1} parent=19 // pred_check
          %p168 = pneg %p59
        $region26: #{tpu_custom_call.1} parent=19 // pred_check_branch
          %170 = sbr.rel (%p168) target = $region28
        $region27: #{tpu_custom_call.1} parent=19 // pred_region
          %p171 = scmp.lt.s32.totalorder %s13, 1
          %s172 = scalar_select %p171, %s13, 1
          %s173 = smul.addr %s172, 8
          %s174 = smul.addr %s173, 4
          %s175 = scalar_lea.vmem %s1, %s174
        $region28: #{tpu_custom_call.1} parent=19 // pred_fallthru
          _
        // Predicated region
        $region29: #{tpu_custom_call.1} parent=19 // pred_check
          %p176 = pneg %p85
        $region30: #{tpu_custom_call.1} parent=19 // pred_check_branch
          %178 = sbr.rel (%p176) target = $region32
        $region31: #{tpu_custom_call.1} parent=19 // pred_region
          %p179 = scmp.lt.s32.totalorder %s13, 1
          %s180 = scalar_select %p179, %s13, 1
          %s181 = smul.addr %s180, 8
          %s182 = smul.addr %s181, 4
          %s183 = scalar_lea.vmem %s2, %s182
        $region32: #{tpu_custom_call.1} parent=19 // pred_fallthru
          _
      $region20: #{tpu_custom_call.1} parent=5 // pred_fallthru
        _
      %p184 = scmp.le.s32.totalorder 1, %s13
      %p185 = scmp.lt.s32.totalorder %s13, 3
      %p186 = pnand %p184, %p185
      %p187 = pneg %p186
      // Predicated region
      $region33: #{tpu_custom_call.1} parent=5 // pred_check
        _
      $region34: #{tpu_custom_call.1} parent=5 // pred_check_branch
        %189 = sbr.rel (%p186) target = $region36
      $region35: #{tpu_custom_call.1} parent=5 // pred_region
        %s190 = ssub.s32 %s13, 1
        %p191 = scmp.lt.s32.totalorder %s18, 1
        %s192 = scalar_select %p191, %s18, 1
        %s193 = smul.addr %s192, 8
        %s194 = smul.addr %s193, 4
        %s195 = scalar_lea.vmem %s0, %s194
        %p196 = pneg %p39
        %p197 = pneg %p36
        %p198 = scmp.lt.s32.totalorder %s18, 1
        %s199 = scalar_select %p198, %s18, 1
        %s200 = smul.addr %s199, 8
        %s201 = smul.addr %s200, 4
        %s202 = scalar_lea.vmem %s1, %s201
        %p203 = pneg %p65
        %p204 = pneg %p62
        %p205 = scmp.lt.s32.totalorder %s18, 1
        %s206 = scalar_select %p205, %s18, 1
        %s207 = smul.addr %s206, 8
        %s208 = smul.addr %s207, 4
        %s209 = scalar_lea.vmem %s2, %s208
        %p210 = pneg %p91
        %p211 = pneg %p88
        %p212 = pneg %p112
        %p213 = pneg %p109
        %p214 = pneg %p138
        %p215 = pneg %p135
        %s216 = sand.u32 %s125, 1
        %s217 = scalar_lea.sflag [#allocation3], %s216
        %s218 = sand.u32 %s125, 1
        %s219 = smul.addr %s218, 32
        %s220 = scalar_lea.vmem [#allocation2], %s219
        %p221 = scmp.lt.s32.totalorder %s18, 1
        %s222 = scalar_select %p221, %s18, 1
        %s223 = smul.addr %s222, 8
        %s224 = smul.addr %s223, 4
        %s225 = scalar_lea.vmem %s0, %s224
        %p226 = scmp.lt.s32.totalorder %s18, 1
        %s227 = scalar_select %p226, %s18, 1
        %s228 = smul.addr %s227, 8
        %s229 = smul.addr %s228, 4
        %s230 = scalar_lea.vmem %s1, %s229
        %p231 = scmp.lt.s32.totalorder %s18, 1
        %s232 = scalar_select %p231, %s18, 1
        %s233 = smul.addr %s232, 8
        %s234 = smul.addr %s233, 4
        %s235 = scalar_lea.vmem %s2, %s234
        %v237 = vld [vmem:[%s225] sm:$0xf]
        %v238 = vld [vmem:[%s225 + $0x4] sm:$0xf]
        %v239 = vld [vmem:[%s225 + $0x8] sm:$0xf]
        %v240 = vld [vmem:[%s225 + $0xc] sm:$0xf]
        %v241 = vld [vmem:[%s225 + $0x10] sm:$0xf]
        %v242 = vld [vmem:[%s225 + $0x14] sm:$0xf]
        %v243 = vld [vmem:[%s225 + $0x18] sm:$0xf]
        %v244 = vld [vmem:[%s225 + $0x1c] sm:$0xf]
        %v245 = vld [vmem:[%s230] sm:$0xf]
        %v246 = vld [vmem:[%s230 + $0x4] sm:$0xf]
        %v247 = vld [vmem:[%s230 + $0x8] sm:$0xf]
        %v248 = vld [vmem:[%s230 + $0xc] sm:$0xf]
        %v249 = vld [vmem:[%s230 + $0x10] sm:$0xf]
        %v250 = vld [vmem:[%s230 + $0x14] sm:$0xf]
        %v251 = vld [vmem:[%s230 + $0x18] sm:$0xf]
        %v252 = vld [vmem:[%s230 + $0x1c] sm:$0xf]
        %v253 = vld [vmem:[%s235] sm:$0xf]
        %v254 = vld [vmem:[%s235 + $0x4] sm:$0xf]
        %v255 = vld [vmem:[%s235 + $0x8] sm:$0xf]
        %v256 = vld [vmem:[%s235 + $0xc] sm:$0xf]
        %v257 = vld [vmem:[%s235 + $0x10] sm:$0xf]
        %v258 = vld [vmem:[%s235 + $0x14] sm:$0xf]
        %v259 = vld [vmem:[%s235 + $0x18] sm:$0xf]
        %v260 = vld [vmem:[%s235 + $0x1c] sm:$0xf]
        %v261 = vld [vmem:[%s3] sm:$0xf]
        %v262 = vld [vmem:[%s3 + $0x4] sm:$0xf]
        %v263 = vld [vmem:[%s3 + $0x8] sm:$0xf]
        %v264 = vld [vmem:[%s3 + $0xc] sm:$0xf]
        %v265 = vld [vmem:[%s3 + $0x10] sm:$0xf]
        %v266 = vld [vmem:[%s3 + $0x14] sm:$0xf]
        %v267 = vld [vmem:[%s3 + $0x18] sm:$0xf]
        %v268 = vld [vmem:[%s3 + $0x1c] sm:$0xf]
        %s269 = scalar_lea.vmem %s3, 32
        %v270 = vld [vmem:[%s269] sm:$0xf]
        %v271 = vld [vmem:[%s269 + $0x4] sm:$0xf]
        %v272 = vld [vmem:[%s269 + $0x8] sm:$0xf]
        %v273 = vld [vmem:[%s269 + $0xc] sm:$0xf]
        %v274 = vld [vmem:[%s269 + $0x10] sm:$0xf]
        %v275 = vld [vmem:[%s269 + $0x14] sm:$0xf]
        %v276 = vld [vmem:[%s269 + $0x18] sm:$0xf]
        %v277 = vld [vmem:[%s269 + $0x1c] sm:$0xf]
        %s278 = scalar_lea.vmem %s3, 64
        %v279 = vld [vmem:[%s278] sm:$0xf]
        %v280 = vld [vmem:[%s278 + $0x4] sm:$0xf]
        %v281 = vld [vmem:[%s278 + $0x8] sm:$0xf]
        %v282 = vld [vmem:[%s278 + $0xc] sm:$0xf]
        %v283 = vld [vmem:[%s278 + $0x10] sm:$0xf]
        %v284 = vld [vmem:[%s278 + $0x14] sm:$0xf]
        %v285 = vld [vmem:[%s278 + $0x18] sm:$0xf]
        %v286 = vld [vmem:[%s278 + $0x1c] sm:$0xf]
        %s287 = scalar_lea.vmem %s3, 96
        %v288 = vld [vmem:[%s287] sm:$0xf]
        %v289 = vld [vmem:[%s287 + $0x4] sm:$0xf]
        %v290 = vld [vmem:[%s287 + $0x8] sm:$0xf]
        %v291 = vld [vmem:[%s287 + $0xc] sm:$0xf]
        %v292 = vld [vmem:[%s287 + $0x10] sm:$0xf]
        %v293 = vld [vmem:[%s287 + $0x14] sm:$0xf]
        %v294 = vld [vmem:[%s287 + $0x18] sm:$0xf]
        %v295 = vld [vmem:[%s287 + $0x1c] sm:$0xf]
        %v296 = vmul.bf16 %v237, %v261
        %v297 = vmul.bf16 %v238, %v262
        %v298 = vmul.bf16 %v239, %v263
        %v299 = vmul.bf16 %v240, %v264
        %v300 = vmul.bf16 %v241, %v265
        %v301 = vmul.bf16 %v242, %v266
        %v302 = vmul.bf16 %v243, %v267
        %v303 = vmul.bf16 %v244, %v268
        %v312 = vunpack.c.l.b16 %v237
        %v313 = vunpack.c.l.b16 %v238
        %v314 = vunpack.c.l.b16 %v239
        %v315 = vunpack.c.l.b16 %v240
        %v316 = vunpack.c.l.b16 %v241
        %v317 = vunpack.c.l.b16 %v242
        %v318 = vunpack.c.l.b16 %v243
        %v319 = vunpack.c.l.b16 %v244
        %v320 = vpack.c.b16 %v313, %v312
        %v321 = vpack.c.b16 %v315, %v314
        %v322 = vpack.c.b16 %v317, %v316
        %v323 = vpack.c.b16 %v319, %v318
        %324 = vrot.lane.b32.xlu0 %v320, 112
        %v325 = vpop.permute.xlu0 %324
        %326 = vrot.lane.b32.xlu0 %v321, 112
        %v327 = vpop.permute.xlu0 %326
        %328 = vrot.lane.b32.xlu0 %v322, 112
        %v329 = vpop.permute.xlu0 %328
        %330 = vrot.lane.b32.xlu0 %v323, 112
        %v331 = vpop.permute.xlu0 %330
        %332 = vrot.lane.b32.xlu0 %v320, 16
        %v333 = vpop.permute.xlu0 %332
        %334 = vrot.lane.b32.xlu0 %v321, 16
        %v335 = vpop.permute.xlu0 %334
        %336 = vrot.lane.b32.xlu0 %v322, 16
        %v337 = vpop.permute.xlu0 %336
        %338 = vrot.lane.b32.xlu0 %v323, 16
        %v339 = vpop.permute.xlu0 %338
        %vm340 = vcmask 130048
        %v343 = vsel %vm340, %v325, %v333
        %v347 = vsel %vm340, %v327, %v335
        %v351 = vsel %vm340, %v329, %v337
        %v355 = vsel %vm340, %v331, %v339
        %v365 = vunpack.c.l.b16 %v270
        %v366 = vunpack.c.l.b16 %v271
        %v367 = vunpack.c.l.b16 %v272
        %v368 = vunpack.c.l.b16 %v273
        %v369 = vunpack.c.l.b16 %v274
        %v370 = vunpack.c.l.b16 %v275
        %v371 = vunpack.c.l.b16 %v276
        %v372 = vunpack.c.l.b16 %v277
        %v373 = vpack.c.b16 %v366, %v365
        %v374 = vpack.c.b16 %v368, %v367
        %v375 = vpack.c.b16 %v370, %v369
        %v376 = vpack.c.b16 %v372, %v371
        %v381 = vmul.bf16 %v343, %v373
        %v382 = vmul.bf16 %v347, %v374
        %v383 = vmul.bf16 %v351, %v375
        %v384 = vmul.bf16 %v355, %v376
        %v389 = vunpack.c.l.b16 %v381
        %v390 = vunpack.c.h.b16 %v381
        %v391 = vunpack.c.l.b16 %v382
        %v392 = vunpack.c.h.b16 %v382
        %v393 = vunpack.c.l.b16 %v383
        %v394 = vunpack.c.h.b16 %v383
        %v395 = vunpack.c.l.b16 %v384
        %v396 = vunpack.c.h.b16 %v384
        %v397 = vpack.c.b16 %v389, %v389
        %v398 = vpack.c.b16 %v390, %v390
        %v399 = vpack.c.b16 %v391, %v391
        %v400 = vpack.c.b16 %v392, %v392
        %v401 = vpack.c.b16 %v393, %v393
        %v402 = vpack.c.b16 %v394, %v394
        %v403 = vpack.c.b16 %v395, %v395
        %v404 = vpack.c.b16 %v396, %v396
        %v413 = vadd.bf16 %v296, %v397
        %v414 = vadd.bf16 %v297, %v398
        %v415 = vadd.bf16 %v298, %v399
        %v416 = vadd.bf16 %v299, %v400
        %v417 = vadd.bf16 %v300, %v401
        %v418 = vadd.bf16 %v301, %v402
        %v419 = vadd.bf16 %v302, %v403
        %v420 = vadd.bf16 %v303, %v404
        %v421 = vmul.bf16 %v245, %v279
        %v422 = vmul.bf16 %v246, %v280
        %v423 = vmul.bf16 %v247, %v281
        %v424 = vmul.bf16 %v248, %v282
        %v425 = vmul.bf16 %v249, %v283
        %v426 = vmul.bf16 %v250, %v284
        %v427 = vmul.bf16 %v251, %v285
        %v428 = vmul.bf16 %v252, %v286
        %v437 = vunpack.c.l.b16 %v245
        %v438 = vunpack.c.l.b16 %v246
        %v439 = vunpack.c.l.b16 %v247
        %v440 = vunpack.c.l.b16 %v248
        %v441 = vunpack.c.l.b16 %v249
        %v442 = vunpack.c.l.b16 %v250
        %v443 = vunpack.c.l.b16 %v251
        %v444 = vunpack.c.l.b16 %v252
        %v445 = vpack.c.b16 %v438, %v437
        %v446 = vpack.c.b16 %v440, %v439
        %v447 = vpack.c.b16 %v442, %v441
        %v448 = vpack.c.b16 %v444, %v443
        %449 = vrot.lane.b32.xlu0 %v445, 112
        %v450 = vpop.permute.xlu0 %449
        %451 = vrot.lane.b32.xlu0 %v446, 112
        %v452 = vpop.permute.xlu0 %451
        %453 = vrot.lane.b32.xlu0 %v447, 112
        %v454 = vpop.permute.xlu0 %453
        %455 = vrot.lane.b32.xlu0 %v448, 112
        %v456 = vpop.permute.xlu0 %455
        %457 = vrot.lane.b32.xlu0 %v445, 16
        %v458 = vpop.permute.xlu0 %457
        %459 = vrot.lane.b32.xlu0 %v446, 16
        %v460 = vpop.permute.xlu0 %459
        %461 = vrot.lane.b32.xlu0 %v447, 16
        %v462 = vpop.permute.xlu0 %461
        %463 = vrot.lane.b32.xlu0 %v448, 16
        %v464 = vpop.permute.xlu0 %463
        %v467 = vsel %vm340, %v450, %v458
        %v471 = vsel %vm340, %v452, %v460
        %v475 = vsel %vm340, %v454, %v462
        %v479 = vsel %vm340, %v456, %v464
        %v489 = vunpack.c.l.b16 %v288
        %v490 = vunpack.c.l.b16 %v289
        %v491 = vunpack.c.l.b16 %v290
        %v492 = vunpack.c.l.b16 %v291
        %v493 = vunpack.c.l.b16 %v292
        %v494 = vunpack.c.l.b16 %v293
        %v495 = vunpack.c.l.b16 %v294
        %v496 = vunpack.c.l.b16 %v295
        %v497 = vpack.c.b16 %v490, %v489
        %v498 = vpack.c.b16 %v492, %v491
        %v499 = vpack.c.b16 %v494, %v493
        %v500 = vpack.c.b16 %v496, %v495
        %v505 = vmul.bf16 %v467, %v497
        %v506 = vmul.bf16 %v471, %v498
        %v507 = vmul.bf16 %v475, %v499
        %v508 = vmul.bf16 %v479, %v500
        %v513 = vunpack.c.l.b16 %v505
        %v514 = vunpack.c.h.b16 %v505
        %v515 = vunpack.c.l.b16 %v506
        %v516 = vunpack.c.h.b16 %v506
        %v517 = vunpack.c.l.b16 %v507
        %v518 = vunpack.c.h.b16 %v507
        %v519 = vunpack.c.l.b16 %v508
        %v520 = vunpack.c.h.b16 %v508
        %v521 = vpack.c.b16 %v513, %v513
        %v522 = vpack.c.b16 %v514, %v514
        %v523 = vpack.c.b16 %v515, %v515
        %v524 = vpack.c.b16 %v516, %v516
        %v525 = vpack.c.b16 %v517, %v517
        %v526 = vpack.c.b16 %v518, %v518
        %v527 = vpack.c.b16 %v519, %v519
        %v528 = vpack.c.b16 %v520, %v520
        %v537 = vadd.bf16 %v421, %v521
        %v538 = vadd.bf16 %v422, %v522
        %v539 = vadd.bf16 %v423, %v523
        %v540 = vadd.bf16 %v424, %v524
        %v541 = vadd.bf16 %v425, %v525
        %v542 = vadd.bf16 %v426, %v526
        %v543 = vadd.bf16 %v427, %v527
        %v544 = vadd.bf16 %v428, %v528
        %v553 = vunpack.c.l.b16 %v413
        %v554 = vunpack.c.l.b16 %v414
        %v555 = vunpack.c.l.b16 %v415
        %v556 = vunpack.c.l.b16 %v416
        %v557 = vunpack.c.l.b16 %v417
        %v558 = vunpack.c.l.b16 %v418
        %v559 = vunpack.c.l.b16 %v419
        %v560 = vunpack.c.l.b16 %v420
        %v561 = vpack.c.b16 %v554, %v553
        %v562 = vpack.c.b16 %v556, %v555
        %v563 = vpack.c.b16 %v558, %v557
        %v564 = vpack.c.b16 %v560, %v559
        %v573 = vunpack.c.l.b16 %v537
        %v574 = vunpack.c.l.b16 %v538
        %v575 = vunpack.c.l.b16 %v539
        %v576 = vunpack.c.l.b16 %v540
        %v577 = vunpack.c.l.b16 %v541
        %v578 = vunpack.c.l.b16 %v542
        %v579 = vunpack.c.l.b16 %v543
        %v580 = vunpack.c.l.b16 %v544
        %v581 = vpack.c.b16 %v574, %v573
        %v582 = vpack.c.b16 %v576, %v575
        %v583 = vpack.c.b16 %v578, %v577
        %v584 = vpack.c.b16 %v580, %v579
        %vm585 = vcmask 261120
        %v587 = vsel %vm585, %v561, 0
        %v590 = vsel %vm585, %v562, 0
        %v593 = vsel %vm585, %v563, 0
        %v596 = vsel %vm585, %v564, 0
        %v599 = vsel %vm585, %v581, 0
        %v602 = vsel %vm585, %v582, 0
        %v605 = vsel %vm585, %v583, 0
        %v608 = vsel %vm585, %v584, 0
        %610 = vmatprep.subr.bf16.mxu0 0
        %611 = vmatpush1.bf16.xpose.msra.mxu0 %v599
        %612 = vmatprep.subr.bf16.mxu0 0
        %613 = vmatpush1.bf16.xpose.msra.mxu0 %v602
        %614 = vmatprep.subr.bf16.mxu0 0
        %615 = vmatpush1.bf16.xpose.msra.mxu0 %v605
        %616 = vmatprep.subr.bf16.mxu0 0
        %617 = vmatpush1.bf16.xpose.msra.mxu0 %v608
        %618 = vmatprep.subr.bf16.mxu0 0
        %619 = vmatpush1.bf16.xpose.msra.mxu0 0
        %620 = vmatprep.subr.bf16.mxu0 0
        %621 = vmatpush1.bf16.xpose.msra.mxu0 0
        %622 = vmatprep.subr.bf16.mxu0 0
        %623 = vmatpush1.bf16.xpose.msra.mxu0 0
        %624 = vmatprep.subr.bf16.mxu0 0
        %625 = vmatpush1.bf16.xpose.msra.mxu0 0
        %626 = vmatprep.subr.bf16.mxu0 0
        %627 = vmatpush1.bf16.xpose.msra.mxu0 0
        %628 = vmatprep.subr.bf16.mxu0 0
        %629 = vmatpush1.bf16.xpose.msra.mxu0 0
        %630 = vmatprep.subr.bf16.mxu0 0
        %631 = vmatpush1.bf16.xpose.msra.mxu0 0
        %632 = vmatprep.subr.bf16.mxu0 0
        %633 = vmatpush1.bf16.xpose.msra.mxu0 0
        %634 = vmatprep.subr.bf16.mxu0 0
        %635 = vmatpush1.bf16.xpose.msra.mxu0 0
        %636 = vmatprep.subr.bf16.mxu0 0
        %637 = vmatpush1.bf16.xpose.msra.mxu0 0
        %638 = vmatprep.subr.bf16.mxu0 0
        %639 = vmatpush1.bf16.xpose.msra.mxu0 0
        %640 = vmatprep.subr.bf16.mxu0 0
        %641 = vmatpush1.bf16.xpose.msra.mxu0 0
        %642 = vmatprep.mubr.bf16.mxu0 0
        %643 = vmatmul.mubr.bf16.gmra.mrb[0].mxu0 %v587
        %v644 = vpop.f32.mrb[0].mxu0
        %v645 = vadd.f32 0.0, %v644
        %v646 = vpop.f32.mrb[0].mxu0
        %v647 = vpop.f32.mrb[0].mxu0
        %v648 = vadd.f32 0.0, %v647
        %v649 = vpop.f32.mrb[0].mxu0
        %650 = vmatprep.mubr.bf16.mxu0 0
        %651 = vmatmul.mubr.bf16.gmra.mrb[0].mxu0 %v590
        %v652 = vpop.f32.mrb[0].mxu0
        %v653 = vadd.f32 0.0, %v652
        %v654 = vpop.f32.mrb[0].mxu0
        %v655 = vpop.f32.mrb[0].mxu0
        %v656 = vadd.f32 0.0, %v655
        %v657 = vpop.f32.mrb[0].mxu0
        %658 = vmatprep.mubr.bf16.mxu0 0
        %659 = vmatmul.mubr.bf16.gmra.mrb[0].mxu0 %v593
        %v660 = vpop.f32.mrb[0].mxu0
        %v661 = vadd.f32 0.0, %v660
        %v662 = vpop.f32.mrb[0].mxu0
        %v663 = vpop.f32.mrb[0].mxu0
        %v664 = vadd.f32 0.0, %v663
        %v665 = vpop.f32.mrb[0].mxu0
        %666 = vmatprep.mubr.bf16.mxu0 0
        %667 = vmatmul.mubr.bf16.gmra.mrb[0].mxu0 %v596
        %v668 = vpop.f32.mrb[0].mxu0
        %v669 = vadd.f32 0.0, %v668
        %v670 = vpop.f32.mrb[0].mxu0
        %v671 = vpop.f32.mrb[0].mxu0
        %v672 = vadd.f32 0.0, %v671
        %v673 = vpop.f32.mrb[0].mxu0
        %674 = vdwg.mxu0
        %vm675 = vcmask 523264
        %v676 = vsel %vm675, %v645, -inf
        %677 = vmax.xlane.f32.xlu0 %v676
        %v678 = vpop.xlane.xlu0 %677
        %v679 = vsel %vm675, %v648, -inf
        %680 = vmax.xlane.f32.xlu0 %v679
        %v681 = vpop.xlane.xlu0 %680
        %v682 = vsel %vm675, %v653, -inf
        %683 = vmax.xlane.f32.xlu0 %v682
        %v684 = vpop.xlane.xlu0 %683
        %v685 = vsel %vm675, %v656, -inf
        %686 = vmax.xlane.f32.xlu0 %v685
        %v687 = vpop.xlane.xlu0 %686
        %v688 = vsel %vm675, %v661, -inf
        %689 = vmax.xlane.f32.xlu0 %v688
        %v690 = vpop.xlane.xlu0 %689
        %v691 = vsel %vm675, %v664, -inf
        %692 = vmax.xlane.f32.xlu0 %v691
        %v693 = vpop.xlane.xlu0 %692
        %v694 = vsel %vm675, %v669, -inf
        %695 = vmax.xlane.f32.xlu0 %v694
        %v696 = vpop.xlane.xlu0 %695
        %v697 = vsel %vm675, %v672, -inf
        %698 = vmax.xlane.f32.xlu0 %v697
        %v699 = vpop.xlane.xlu0 %698
        %v700 = vsub.f32 %v645, %v678
        %v701 = vsub.f32 %v648, %v681
        %v702 = vsub.f32 %v653, %v684
        %v703 = vsub.f32 %v656, %v687
        %v704 = vsub.f32 %v661, %v690
        %v705 = vsub.f32 %v664, %v693
        %v706 = vsub.f32 %v669, %v696
        %v707 = vsub.f32 %v672, %v699
        %v708 = vmul.f32 %v700, 1.442695
        %v709 = vpow.pop %v708
        %v710 = vmul.f32 %v701, 1.442695
        %v711 = vpow.pop %v710
        %v712 = vmul.f32 %v702, 1.442695
        %v713 = vpow.pop %v712
        %v714 = vmul.f32 %v703, 1.442695
        %v715 = vpow.pop %v714
        %v716 = vmul.f32 %v704, 1.442695
        %v717 = vpow.pop %v716
        %v718 = vmul.f32 %v705, 1.442695
        %v719 = vpow.pop %v718
        %v720 = vmul.f32 %v706, 1.442695
        %v721 = vpow.pop %v720
        %v722 = vmul.f32 %v707, 1.442695
        %v723 = vpow.pop %v722
        %v724 = vsel %vm675, %v709, 0.0
        %725 = vadd.xlane.f32.xlu0 %v724
        %v726 = vpop.xlane.xlu0 %725
        %v727 = vsel %vm675, %v711, 0.0
        %728 = vadd.xlane.f32.xlu0 %v727
        %v729 = vpop.xlane.xlu0 %728
        %v730 = vsel %vm675, %v713, 0.0
        %731 = vadd.xlane.f32.xlu0 %v730
        %v732 = vpop.xlane.xlu0 %731
        %v733 = vsel %vm675, %v715, 0.0
        %734 = vadd.xlane.f32.xlu0 %v733
        %v735 = vpop.xlane.xlu0 %734
        %v736 = vsel %vm675, %v717, 0.0
        %737 = vadd.xlane.f32.xlu0 %v736
        %v738 = vpop.xlane.xlu0 %737
        %v739 = vsel %vm675, %v719, 0.0
        %740 = vadd.xlane.f32.xlu0 %v739
        %v741 = vpop.xlane.xlu0 %740
        %v742 = vsel %vm675, %v721, 0.0
        %743 = vadd.xlane.f32.xlu0 %v742
        %v744 = vpop.xlane.xlu0 %743
        %v745 = vsel %vm675, %v723, 0.0
        %746 = vadd.xlane.f32.xlu0 %v745
        %v747 = vpop.xlane.xlu0 %746
        %v748 = vpack.c.bf16 %v711, %v709
        %v749 = vpack.c.bf16 %v715, %v713
        %v750 = vpack.c.bf16 %v719, %v717
        %v751 = vpack.c.bf16 %v723, %v721
        %v760 = vunpack.c.l.b16 %v253
        %v761 = vunpack.c.l.b16 %v254
        %v762 = vunpack.c.l.b16 %v255
        %v763 = vunpack.c.l.b16 %v256
        %v764 = vunpack.c.l.b16 %v257
        %v765 = vunpack.c.l.b16 %v258
        %v766 = vunpack.c.l.b16 %v259
        %v767 = vunpack.c.l.b16 %v260
        %v768 = vpack.c.b16 %v761, %v760
        %v769 = vpack.c.b16 %v763, %v762
        %v770 = vpack.c.b16 %v765, %v764
        %v771 = vpack.c.b16 %v767, %v766
        %v777 = vsel %vm675, %v748, 0
        %v780 = vsel %vm675, %v749, 0
        %v783 = vsel %vm675, %v750, 0
        %v786 = vsel %vm675, %v751, 0
        %788 = vmatprep.subr.bf16.mxu0 0
        %789 = vmatpush1.bf16.msra.mxu0 %v768
        %790 = vmatprep.subr.bf16.mxu0 0
        %791 = vmatpush1.bf16.msra.mxu0 %v769
        %792 = vmatprep.subr.bf16.mxu0 0
        %793 = vmatpush1.bf16.msra.mxu0 %v770
        %794 = vmatprep.subr.bf16.mxu0 0
        %795 = vmatpush1.bf16.msra.mxu0 %v771
        %796 = vmatprep.subr.bf16.mxu0 0
        %797 = vmatpush1.bf16.msra.mxu0 0
        %798 = vmatprep.subr.bf16.mxu0 0
        %799 = vmatpush1.bf16.msra.mxu0 0
        %800 = vmatprep.subr.bf16.mxu0 0
        %801 = vmatpush1.bf16.msra.mxu0 0
        %802 = vmatprep.subr.bf16.mxu0 0
        %803 = vmatpush1.bf16.msra.mxu0 0
        %804 = vmatprep.subr.bf16.mxu0 0
        %805 = vmatpush1.bf16.msra.mxu0 0
        %806 = vmatprep.subr.bf16.mxu0 0
        %807 = vmatpush1.bf16.msra.mxu0 0
        %808 = vmatprep.subr.bf16.mxu0 0
        %809 = vmatpush1.bf16.msra.mxu0 0
        %810 = vmatprep.subr.bf16.mxu0 0
        %811 = vmatpush1.bf16.msra.mxu0 0
        %812 = vmatprep.subr.bf16.mxu0 0
        %813 = vmatpush1.bf16.msra.mxu0 0
        %814 = vmatprep.subr.bf16.mxu0 0
        %815 = vmatpush1.bf16.msra.mxu0 0
        %816 = vmatprep.subr.bf16.mxu0 0
        %817 = vmatpush1.bf16.msra.mxu0 0
        %818 = vmatprep.subr.bf16.mxu0 0
        %819 = vmatpush1.bf16.msra.mxu0 0
        %820 = vmatprep.mubr.bf16.mxu0 0
        %821 = vmatmul.mubr.bf16.gmra.mrb[0].mxu0 %v777
        %v822 = vpop.f32.mrb[0].mxu0
        %v823 = vadd.f32 0.0, %v822
        %v824 = vpop.f32.mrb[0].mxu0
        %v825 = vpop.f32.mrb[0].mxu0
        %v826 = vadd.f32 0.0, %v825
        %v827 = vpop.f32.mrb[0].mxu0
        %828 = vmatprep.mubr.bf16.mxu0 0
        %829 = vmatmul.mubr.bf16.gmra.mrb[0].mxu0 %v780
        %v830 = vpop.f32.mrb[0].mxu0
        %v831 = vadd.f32 0.0, %v830
        %v832 = vpop.f32.mrb[0].mxu0
        %v833 = vpop.f32.mrb[0].mxu0
        %v834 = vadd.f32 0.0, %v833
        %v835 = vpop.f32.mrb[0].mxu0
        %836 = vmatprep.mubr.bf16.mxu0 0
        %837 = vmatmul.mubr.bf16.gmra.mrb[0].mxu0 %v783
        %v838 = vpop.f32.mrb[0].mxu0
        %v839 = vadd.f32 0.0, %v838
        %v840 = vpop.f32.mrb[0].mxu0
        %v841 = vpop.f32.mrb[0].mxu0
        %v842 = vadd.f32 0.0, %v841
        %v843 = vpop.f32.mrb[0].mxu0
        %844 = vmatprep.mubr.bf16.mxu0 0
        %845 = vmatmul.mubr.bf16.gmra.mrb[0].mxu0 %v786
        %v846 = vpop.f32.mrb[0].mxu0
        %v847 = vadd.f32 0.0, %v846
        %v848 = vpop.f32.mrb[0].mxu0
        %v849 = vpop.f32.mrb[0].mxu0
        %v850 = vadd.f32 0.0, %v849
        %v851 = vpop.f32.mrb[0].mxu0
        %852 = vdwg.mxu0
        %v853 = vrcp.pop %v726
        %v854 = vrcp.pop %v729
        %v855 = vrcp.pop %v732
        %v856 = vrcp.pop %v735
        %v857 = vrcp.pop %v738
        %v858 = vrcp.pop %v741
        %v859 = vrcp.pop %v744
        %v860 = vrcp.pop %v747
        %v861 = vmul.f32 %v823, %v853
        %v862 = vmul.f32 %v826, %v854
        %v863 = vmul.f32 %v831, %v855
        %v864 = vmul.f32 %v834, %v856
        %v865 = vmul.f32 %v839, %v857
        %v866 = vmul.f32 %v842, %v858
        %v867 = vmul.f32 %v847, %v859
        %v868 = vmul.f32 %v850, %v860
        %877 = vrot.lane.b32.xlu0 %v261, 32
        %v878 = vpop.permute.xlu0 %877
        %879 = vrot.lane.b32.xlu0 %v262, 32
        %v880 = vpop.permute.xlu0 %879
        %881 = vrot.lane.b32.xlu0 %v263, 32
        %v882 = vpop.permute.xlu0 %881
        %883 = vrot.lane.b32.xlu0 %v264, 32
        %v884 = vpop.permute.xlu0 %883
        %885 = vrot.lane.b32.xlu0 %v265, 32
        %v886 = vpop.permute.xlu0 %885
        %887 = vrot.lane.b32.xlu0 %v266, 32
        %v888 = vpop.permute.xlu0 %887
        %889 = vrot.lane.b32.xlu0 %v267, 32
        %v890 = vpop.permute.xlu0 %889
        %891 = vrot.lane.b32.xlu0 %v268, 32
        %v892 = vpop.permute.xlu0 %891
        %v901 = vmul.bf16 %v237, %v878
        %v902 = vmul.bf16 %v238, %v880
        %v903 = vmul.bf16 %v239, %v882
        %v904 = vmul.bf16 %v240, %v884
        %v905 = vmul.bf16 %v241, %v886
        %v906 = vmul.bf16 %v242, %v888
        %v907 = vmul.bf16 %v243, %v890
        %v908 = vmul.bf16 %v244, %v892
        %909 = vrot.lane.b32.xlu0 %v320, 80
        %v910 = vpop.permute.xlu0 %909
        %911 = vrot.lane.b32.xlu0 %v321, 80
        %v912 = vpop.permute.xlu0 %911
        %913 = vrot.lane.b32.xlu0 %v322, 80
        %v914 = vpop.permute.xlu0 %913
        %915 = vrot.lane.b32.xlu0 %v323, 80
        %v916 = vpop.permute.xlu0 %915
        %v918 = vsel %vm340, %v910, %v325
        %v921 = vsel %vm340, %v912, %v327
        %v924 = vsel %vm340, %v914, %v329
        %v927 = vsel %vm340, %v916, %v331
        %v929 = vmul.bf16 %v918, %v373
        %v930 = vmul.bf16 %v921, %v374
        %v931 = vmul.bf16 %v924, %v375
        %v932 = vmul.bf16 %v927, %v376
        %v937 = vunpack.c.l.b16 %v929
        %v938 = vunpack.c.h.b16 %v929
        %v939 = vunpack.c.l.b16 %v930
        %v940 = vunpack.c.h.b16 %v930
        %v941 = vunpack.c.l.b16 %v931
        %v942 = vunpack.c.h.b16 %v931
        %v943 = vunpack.c.l.b16 %v932
        %v944 = vunpack.c.h.b16 %v932
        %v945 = vpack.c.b16 %v937, %v937
        %v946 = vpack.c.b16 %v938, %v938
        %v947 = vpack.c.b16 %v939, %v939
        %v948 = vpack.c.b16 %v940, %v940
        %v949 = vpack.c.b16 %v941, %v941
        %v950 = vpack.c.b16 %v942, %v942
        %v951 = vpack.c.b16 %v943, %v943
        %v952 = vpack.c.b16 %v944, %v944
        %953 = vrot.lane.b32.xlu0 %v945, 32
        %v954 = vpop.permute.xlu0 %953
        %955 = vrot.lane.b32.xlu0 %v946, 32
        %v956 = vpop.permute.xlu0 %955
        %957 = vrot.lane.b32.xlu0 %v947, 32
        %v958 = vpop.permute.xlu0 %957
        %959 = vrot.lane.b32.xlu0 %v948, 32
        %v960 = vpop.permute.xlu0 %959
        %961 = vrot.lane.b32.xlu0 %v949, 32
        %v962 = vpop.permute.xlu0 %961
        %963 = vrot.lane.b32.xlu0 %v950, 32
        %v964 = vpop.permute.xlu0 %963
        %965 = vrot.lane.b32.xlu0 %v951, 32
        %v966 = vpop.permute.xlu0 %965
        %967 = vrot.lane.b32.xlu0 %v952, 32
        %v968 = vpop.permute.xlu0 %967
        %v977 = vadd.bf16 %v901, %v954
        %v978 = vadd.bf16 %v902, %v956
        %v979 = vadd.bf16 %v903, %v958
        %v980 = vadd.bf16 %v904, %v960
        %v981 = vadd.bf16 %v905, %v962
        %v982 = vadd.bf16 %v906, %v964
        %v983 = vadd.bf16 %v907, %v966
        %v984 = vadd.bf16 %v908, %v968
        %993 = vrot.lane.b32.xlu0 %v279, 32
        %v994 = vpop.permute.xlu0 %993
        %995 = vrot.lane.b32.xlu0 %v280, 32
        %v996 = vpop.permute.xlu0 %995
        %997 = vrot.lane.b32.xlu0 %v281, 32
        %v998 = vpop.permute.xlu0 %997
        %999 = vrot.lane.b32.xlu0 %v282, 32
        %v1000 = vpop.permute.xlu0 %999
        %1001 = vrot.lane.b32.xlu0 %v283, 32
        %v1002 = vpop.permute.xlu0 %1001
        %1003 = vrot.lane.b32.xlu0 %v284, 32
        %v1004 = vpop.permute.xlu0 %1003
        %1005 = vrot.lane.b32.xlu0 %v285, 32
        %v1006 = vpop.permute.xlu0 %1005
        %1007 = vrot.lane.b32.xlu0 %v286, 32
        %v1008 = vpop.permute.xlu0 %1007
        %v1017 = vmul.bf16 %v245, %v994
        %v1018 = vmul.bf16 %v246, %v996
        %v1019 = vmul.bf16 %v247, %v998
        %v1020 = vmul.bf16 %v248, %v1000
        %v1021 = vmul.bf16 %v249, %v1002
        %v1022 = vmul.bf16 %v250, %v1004
        %v1023 = vmul.bf16 %v251, %v1006
        %v1024 = vmul.bf16 %v252, %v1008
        %1025 = vrot.lane.b32.xlu0 %v445, 80
        %v1026 = vpop.permute.xlu0 %1025
        %1027 = vrot.lane.b32.xlu0 %v446, 80
        %v1028 = vpop.permute.xlu0 %1027
        %1029 = vrot.lane.b32.xlu0 %v447, 80
        %v1030 = vpop.permute.xlu0 %1029
        %1031 = vrot.lane.b32.xlu0 %v448, 80
        %v1032 = vpop.permute.xlu0 %1031
        %v1034 = vsel %vm340, %v1026, %v450
        %v1037 = vsel %vm340, %v1028, %v452
        %v1040 = vsel %vm340, %v1030, %v454
        %v1043 = vsel %vm340, %v1032, %v456
        %v1045 = vmul.bf16 %v1034, %v497
        %v1046 = vmul.bf16 %v1037, %v498
        %v1047 = vmul.bf16 %v1040, %v499
        %v1048 = vmul.bf16 %v1043, %v500
        %v1053 = vunpack.c.l.b16 %v1045
        %v1054 = vunpack.c.h.b16 %v1045
        %v1055 = vunpack.c.l.b16 %v1046
        %v1056 = vunpack.c.h.b16 %v1046
        %v1057 = vunpack.c.l.b16 %v1047
        %v1058 = vunpack.c.h.b16 %v1047
        %v1059 = vunpack.c.l.b16 %v1048
        %v1060 = vunpack.c.h.b16 %v1048
        %v1061 = vpack.c.b16 %v1053, %v1053
        %v1062 = vpack.c.b16 %v1054, %v1054
        %v1063 = vpack.c.b16 %v1055, %v1055
        %v1064 = vpack.c.b16 %v1056, %v1056
        %v1065 = vpack.c.b16 %v1057, %v1057
        %v1066 = vpack.c.b16 %v1058, %v1058
        %v1067 = vpack.c.b16 %v1059, %v1059
        %v1068 = vpack.c.b16 %v1060, %v1060
        %1069 = vrot.lane.b32.xlu0 %v1061, 32
        %v1070 = vpop.permute.xlu0 %1069
        %1071 = vrot.lane.b32.xlu0 %v1062, 32
        %v1072 = vpop.permute.xlu0 %1071
        %1073 = vrot.lane.b32.xlu0 %v1063, 32
        %v1074 = vpop.permute.xlu0 %1073
        %1075 = vrot.lane.b32.xlu0 %v1064, 32
        %v1076 = vpop.permute.xlu0 %1075
        %1077 = vrot.lane.b32.xlu0 %v1065, 32
        %v1078 = vpop.permute.xlu0 %1077
        %1079 = vrot.lane.b32.xlu0 %v1066, 32
        %v1080 = vpop.permute.xlu0 %1079
        %1081 = vrot.lane.b32.xlu0 %v1067, 32
        %v1082 = vpop.permute.xlu0 %1081
        %1083 = vrot.lane.b32.xlu0 %v1068, 32
        %v1084 = vpop.permute.xlu0 %1083
        %v1093 = vadd.bf16 %v1017, %v1070
        %v1094 = vadd.bf16 %v1018, %v1072
        %v1095 = vadd.bf16 %v1019, %v1074
        %v1096 = vadd.bf16 %v1020, %v1076
        %v1097 = vadd.bf16 %v1021, %v1078
        %v1098 = vadd.bf16 %v1022, %v1080
        %v1099 = vadd.bf16 %v1023, %v1082
        %v1100 = vadd.bf16 %v1024, %v1084
        %v1109 = vunpack.c.l.b16 %v977
        %v1110 = vunpack.c.l.b16 %v978
        %v1111 = vunpack.c.l.b16 %v979
        %v1112 = vunpack.c.l.b16 %v980
        %v1113 = vunpack.c.l.b16 %v981
        %v1114 = vunpack.c.l.b16 %v982
        %v1115 = vunpack.c.l.b16 %v983
        %v1116 = vunpack.c.l.b16 %v984
        %v1117 = vpack.c.b16 %v1110, %v1109
        %v1118 = vpack.c.b16 %v1112, %v1111
        %v1119 = vpack.c.b16 %v1114, %v1113
        %v1120 = vpack.c.b16 %v1116, %v1115
        %1121 = vrot.lane.b32.xlu0 %v1117, 96
        %v1122 = vpop.permute.xlu0 %1121
        %1123 = vrot.lane.b32.xlu0 %v1118, 96
        %v1124 = vpop.permute.xlu0 %1123
        %1125 = vrot.lane.b32.xlu0 %v1119, 96
        %v1126 = vpop.permute.xlu0 %1125
        %1127 = vrot.lane.b32.xlu0 %v1120, 96
        %v1128 = vpop.permute.xlu0 %1127
        %v1137 = vunpack.c.l.b16 %v1093
        %v1138 = vunpack.c.l.b16 %v1094
        %v1139 = vunpack.c.l.b16 %v1095
        %v1140 = vunpack.c.l.b16 %v1096
        %v1141 = vunpack.c.l.b16 %v1097
        %v1142 = vunpack.c.l.b16 %v1098
        %v1143 = vunpack.c.l.b16 %v1099
        %v1144 = vunpack.c.l.b16 %v1100
        %v1145 = vpack.c.b16 %v1138, %v1137
        %v1146 = vpack.c.b16 %v1140, %v1139
        %v1147 = vpack.c.b16 %v1142, %v1141
        %v1148 = vpack.c.b16 %v1144, %v1143
        %1149 = vrot.lane.b32.xlu0 %v1145, 96
        %v1150 = vpop.permute.xlu0 %1149
        %1151 = vrot.lane.b32.xlu0 %v1146, 96
        %v1152 = vpop.permute.xlu0 %1151
        %1153 = vrot.lane.b32.xlu0 %v1147, 96
        %v1154 = vpop.permute.xlu0 %1153
        %1155 = vrot.lane.b32.xlu0 %v1148, 96
        %v1156 = vpop.permute.xlu0 %1155
        %v1158 = vsel %vm585, %v1122, 0
        %v1161 = vsel %vm585, %v1124, 0
        %v1164 = vsel %vm585, %v1126, 0
        %v1167 = vsel %vm585, %v1128, 0
        %v1170 = vsel %vm585, %v1150, 0
        %v1173 = vsel %vm585, %v1152, 0
        %v1176 = vsel %vm585, %v1154, 0
        %v1179 = vsel %vm585, %v1156, 0
        %1181 = vmatprep.subr.bf16.mxu0 0
        %1182 = vmatpush1.bf16.xpose.msra.mxu0 %v1170
        %1183 = vmatprep.subr.bf16.mxu0 0
        %1184 = vmatpush1.bf16.xpose.msra.mxu0 %v1173
        %1185 = vmatprep.subr.bf16.mxu0 0
        %1186 = vmatpush1.bf16.xpose.msra.mxu0 %v1176
        %1187 = vmatprep.subr.bf16.mxu0 0
        %1188 = vmatpush1.bf16.xpose.msra.mxu0 %v1179
        %1189 = vmatprep.subr.bf16.mxu0 0
        %1190 = vmatpush1.bf16.xpose.msra.mxu0 0
        %1191 = vmatprep.subr.bf16.mxu0 0
        %1192 = vmatpush1.bf16.xpose.msra.mxu0 0
        %1193 = vmatprep.subr.bf16.mxu0 0
        %1194 = vmatpush1.bf16.xpose.msra.mxu0 0
        %1195 = vmatprep.subr.bf16.mxu0 0
        %1196 = vmatpush1.bf16.xpose.msra.mxu0 0
        %1197 = vmatprep.subr.bf16.mxu0 0
        %1198 = vmatpush1.bf16.xpose.msra.mxu0 0
        %1199 = vmatprep.subr.bf16.mxu0 0
        %1200 = vmatpush1.bf16.xpose.msra.mxu0 0
        %1201 = vmatprep.subr.bf16.mxu0 0
        %1202 = vmatpush1.bf16.xpose.msra.mxu0 0
        %1203 = vmatprep.subr.bf16.mxu0 0
        %1204 = vmatpush1.bf16.xpose.msra.mxu0 0
        %1205 = vmatprep.subr.bf16.mxu0 0
        %1206 = vmatpush1.bf16.xpose.msra.mxu0 0
        %1207 = vmatprep.subr.bf16.mxu0 0
        %1208 = vmatpush1.bf16.xpose.msra.mxu0 0
        %1209 = vmatprep.subr.bf16.mxu0 0
        %1210 = vmatpush1.bf16.xpose.msra.mxu0 0
        %1211 = vmatprep.subr.bf16.mxu0 0
        %1212 = vmatpush1.bf16.xpose.msra.mxu0 0
        %1213 = vmatprep.mubr.bf16.mxu0 0
        %1214 = vmatmul.mubr.bf16.gmra.mrb[0].mxu0 %v1158
        %v1215 = vpop.f32.mrb[0].mxu0
        %v1216 = vadd.f32 0.0, %v1215
        %v1217 = vpop.f32.mrb[0].mxu0
        %v1218 = vpop.f32.mrb[0].mxu0
        %v1219 = vadd.f32 0.0, %v1218
        %v1220 = vpop.f32.mrb[0].mxu0
        %1221 = vmatprep.mubr.bf16.mxu0 0
        %1222 = vmatmul.mubr.bf16.gmra.mrb[0].mxu0 %v1161
        %v1223 = vpop.f32.mrb[0].mxu0
        %v1224 = vadd.f32 0.0, %v1223
        %v1225 = vpop.f32.mrb[0].mxu0
        %v1226 = vpop.f32.mrb[0].mxu0
        %v1227 = vadd.f32 0.0, %v1226
        %v1228 = vpop.f32.mrb[0].mxu0
        %1229 = vmatprep.mubr.bf16.mxu0 0
        %1230 = vmatmul.mubr.bf16.gmra.mrb[0].mxu0 %v1164
        %v1231 = vpop.f32.mrb[0].mxu0
        %v1232 = vadd.f32 0.0, %v1231
        %v1233 = vpop.f32.mrb[0].mxu0
        %v1234 = vpop.f32.mrb[0].mxu0
        %v1235 = vadd.f32 0.0, %v1234
        %v1236 = vpop.f32.mrb[0].mxu0
        %1237 = vmatprep.mubr.bf16.mxu0 0
        %1238 = vmatmul.mubr.bf16.gmra.mrb[0].mxu0 %v1167
        %v1239 = vpop.f32.mrb[0].mxu0
        %v1240 = vadd.f32 0.0, %v1239
        %v1241 = vpop.f32.mrb[0].mxu0
        %v1242 = vpop.f32.mrb[0].mxu0
        %v1243 = vadd.f32 0.0, %v1242
        %v1244 = vpop.f32.mrb[0].mxu0
        %1245 = vdwg.mxu0
        %v1246 = vsel %vm675, %v1216, -inf
        %1247 = vmax.xlane.f32.xlu0 %v1246
        %v1248 = vpop.xlane.xlu0 %1247
        %v1249 = vsel %vm675, %v1219, -inf
        %1250 = vmax.xlane.f32.xlu0 %v1249
        %v1251 = vpop.xlane.xlu0 %1250
        %v1252 = vsel %vm675, %v1224, -inf
        %1253 = vmax.xlane.f32.xlu0 %v1252
        %v1254 = vpop.xlane.xlu0 %1253
        %v1255 = vsel %vm675, %v1227, -inf
        %1256 = vmax.xlane.f32.xlu0 %v1255
        %v1257 = vpop.xlane.xlu0 %1256
        %v1258 = vsel %vm675, %v1232, -inf
        %1259 = vmax.xlane.f32.xlu0 %v1258
        %v1260 = vpop.xlane.xlu0 %1259
        %v1261 = vsel %vm675, %v1235, -inf
        %1262 = vmax.xlane.f32.xlu0 %v1261
        %v1263 = vpop.xlane.xlu0 %1262
        %v1264 = vsel %vm675, %v1240, -inf
        %1265 = vmax.xlane.f32.xlu0 %v1264
        %v1266 = vpop.xlane.xlu0 %1265
        %v1267 = vsel %vm675, %v1243, -inf
        %1268 = vmax.xlane.f32.xlu0 %v1267
        %v1269 = vpop.xlane.xlu0 %1268
        %v1270 = vsub.f32 %v1216, %v1248
        %v1271 = vsub.f32 %v1219, %v1251
        %v1272 = vsub.f32 %v1224, %v1254
        %v1273 = vsub.f32 %v1227, %v1257
        %v1274 = vsub.f32 %v1232, %v1260
        %v1275 = vsub.f32 %v1235, %v1263
        %v1276 = vsub.f32 %v1240, %v1266
        %v1277 = vsub.f32 %v1243, %v1269
        %v1278 = vmul.f32 %v1270, 1.442695
        %v1279 = vpow.pop %v1278
        %v1280 = vmul.f32 %v1271, 1.442695
        %v1281 = vpow.pop %v1280
        %v1282 = vmul.f32 %v1272, 1.442695
        %v1283 = vpow.pop %v1282
        %v1284 = vmul.f32 %v1273, 1.442695
        %v1285 = vpow.pop %v1284
        %v1286 = vmul.f32 %v1274, 1.442695
        %v1287 = vpow.pop %v1286
        %v1288 = vmul.f32 %v1275, 1.442695
        %v1289 = vpow.pop %v1288
        %v1290 = vmul.f32 %v1276, 1.442695
        %v1291 = vpow.pop %v1290
        %v1292 = vmul.f32 %v1277, 1.442695
        %v1293 = vpow.pop %v1292
        %v1294 = vsel %vm675, %v1279, 0.0
        %1295 = vadd.xlane.f32.xlu0 %v1294
        %v1296 = vpop.xlane.xlu0 %1295
        %v1297 = vsel %vm675, %v1281, 0.0
        %1298 = vadd.xlane.f32.xlu0 %v1297
        %v1299 = vpop.xlane.xlu0 %1298
        %v1300 = vsel %vm675, %v1283, 0.0
        %1301 = vadd.xlane.f32.xlu0 %v1300
        %v1302 = vpop.xlane.xlu0 %1301
        %v1303 = vsel %vm675, %v1285, 0.0
        %1304 = vadd.xlane.f32.xlu0 %v1303
        %v1305 = vpop.xlane.xlu0 %1304
        %v1306 = vsel %vm675, %v1287, 0.0
        %1307 = vadd.xlane.f32.xlu0 %v1306
        %v1308 = vpop.xlane.xlu0 %1307
        %v1309 = vsel %vm675, %v1289, 0.0
        %1310 = vadd.xlane.f32.xlu0 %v1309
        %v1311 = vpop.xlane.xlu0 %1310
        %v1312 = vsel %vm675, %v1291, 0.0
        %1313 = vadd.xlane.f32.xlu0 %v1312
        %v1314 = vpop.xlane.xlu0 %1313
        %v1315 = vsel %vm675, %v1293, 0.0
        %1316 = vadd.xlane.f32.xlu0 %v1315
        %v1317 = vpop.xlane.xlu0 %1316
        %v1318 = vpack.c.bf16 %v1281, %v1279
        %v1319 = vpack.c.bf16 %v1285, %v1283
        %v1320 = vpack.c.bf16 %v1289, %v1287
        %v1321 = vpack.c.bf16 %v1293, %v1291
        %1322 = vrot.lane.b32.xlu0 %v768, 96
        %v1323 = vpop.permute.xlu0 %1322
        %1324 = vrot.lane.b32.xlu0 %v769, 96
        %v1325 = vpop.permute.xlu0 %1324
        %1326 = vrot.lane.b32.xlu0 %v770, 96
        %v1327 = vpop.permute.xlu0 %1326
        %1328 = vrot.lane.b32.xlu0 %v771, 96
        %v1329 = vpop.permute.xlu0 %1328
        %v1335 = vsel %vm675, %v1318, 0
        %v1338 = vsel %vm675, %v1319, 0
        %v1341 = vsel %vm675, %v1320, 0
        %v1344 = vsel %vm675, %v1321, 0
        %1346 = vmatprep.subr.bf16.mxu0 0
        %1347 = vmatpush1.bf16.msra.mxu0 %v1323
        %1348 = vmatprep.subr.bf16.mxu0 0
        %1349 = vmatpush1.bf16.msra.mxu0 %v1325
        %1350 = vmatprep.subr.bf16.mxu0 0
        %1351 = vmatpush1.bf16.msra.mxu0 %v1327
        %1352 = vmatprep.subr.bf16.mxu0 0
        %1353 = vmatpush1.bf16.msra.mxu0 %v1329
        %1354 = vmatprep.subr.bf16.mxu0 0
        %1355 = vmatpush1.bf16.msra.mxu0 0
        %1356 = vmatprep.subr.bf16.mxu0 0
        %1357 = vmatpush1.bf16.msra.mxu0 0
        %1358 = vmatprep.subr.bf16.mxu0 0
        %1359 = vmatpush1.bf16.msra.mxu0 0
        %1360 = vmatprep.subr.bf16.mxu0 0
        %1361 = vmatpush1.bf16.msra.mxu0 0
        %1362 = vmatprep.subr.bf16.mxu0 0
        %1363 = vmatpush1.bf16.msra.mxu0 0
        %1364 = vmatprep.subr.bf16.mxu0 0
        %1365 = vmatpush1.bf16.msra.mxu0 0
        %1366 = vmatprep.subr.bf16.mxu0 0
        %1367 = vmatpush1.bf16.msra.mxu0 0
        %1368 = vmatprep.subr.bf16.mxu0 0
        %1369 = vmatpush1.bf16.msra.mxu0 0
        %1370 = vmatprep.subr.bf16.mxu0 0
        %1371 = vmatpush1.bf16.msra.mxu0 0
        %1372 = vmatprep.subr.bf16.mxu0 0
        %1373 = vmatpush1.bf16.msra.mxu0 0
        %1374 = vmatprep.subr.bf16.mxu0 0
        %1375 = vmatpush1.bf16.msra.mxu0 0
        %1376 = vmatprep.subr.bf16.mxu0 0
        %1377 = vmatpush1.bf16.msra.mxu0 0
        %1378 = vmatprep.mubr.bf16.mxu0 0
        %1379 = vmatmul.mubr.bf16.gmra.mrb[0].mxu0 %v1335
        %v1380 = vpop.f32.mrb[0].mxu0
        %v1381 = vadd.f32 0.0, %v1380
        %v1382 = vpop.f32.mrb[0].mxu0
        %v1383 = vpop.f32.mrb[0].mxu0
        %v1384 = vadd.f32 0.0, %v1383
        %v1385 = vpop.f32.mrb[0].mxu0
        %1386 = vmatprep.mubr.bf16.mxu0 0
        %1387 = vmatmul.mubr.bf16.gmra.mrb[0].mxu0 %v1338
        %v1388 = vpop.f32.mrb[0].mxu0
        %v1389 = vadd.f32 0.0, %v1388
        %v1390 = vpop.f32.mrb[0].mxu0
        %v1391 = vpop.f32.mrb[0].mxu0
        %v1392 = vadd.f32 0.0, %v1391
        %v1393 = vpop.f32.mrb[0].mxu0
        %1394 = vmatprep.mubr.bf16.mxu0 0
        %1395 = vmatmul.mubr.bf16.gmra.mrb[0].mxu0 %v1341
        %v1396 = vpop.f32.mrb[0].mxu0
        %v1397 = vadd.f32 0.0, %v1396
        %v1398 = vpop.f32.mrb[0].mxu0
        %v1399 = vpop.f32.mrb[0].mxu0
        %v1400 = vadd.f32 0.0, %v1399
        %v1401 = vpop.f32.mrb[0].mxu0
        %1402 = vmatprep.mubr.bf16.mxu0 0
        %1403 = vmatmul.mubr.bf16.gmra.mrb[0].mxu0 %v1344
        %v1404 = vpop.f32.mrb[0].mxu0
        %v1405 = vadd.f32 0.0, %v1404
        %v1406 = vpop.f32.mrb[0].mxu0
        %v1407 = vpop.f32.mrb[0].mxu0
        %v1408 = vadd.f32 0.0, %v1407
        %v1409 = vpop.f32.mrb[0].mxu0
        %1410 = vdwg.mxu0
        %v1411 = vrcp.pop %v1296
        %v1412 = vrcp.pop %v1299
        %v1413 = vrcp.pop %v1302
        %v1414 = vrcp.pop %v1305
        %v1415 = vrcp.pop %v1308
        %v1416 = vrcp.pop %v1311
        %v1417 = vrcp.pop %v1314
        %v1418 = vrcp.pop %v1317
        %v1419 = vmul.f32 %v1381, %v1411
        %v1420 = vmul.f32 %v1384, %v1412
        %v1421 = vmul.f32 %v1389, %v1413
        %v1422 = vmul.f32 %v1392, %v1414
        %v1423 = vmul.f32 %v1397, %v1415
        %v1424 = vmul.f32 %v1400, %v1416
        %v1425 = vmul.f32 %v1405, %v1417
        %v1426 = vmul.f32 %v1408, %v1418
        %1427 = vrot.lane.b32.xlu0 %v261, 64
        %v1428 = vpop.permute.xlu0 %1427
        %1429 = vrot.lane.b32.xlu0 %v262, 64
        %v1430 = vpop.permute.xlu0 %1429
        %1431 = vrot.lane.b32.xlu0 %v263, 64
        %v1432 = vpop.permute.xlu0 %1431
        %1433 = vrot.lane.b32.xlu0 %v264, 64
        %v1434 = vpop.permute.xlu0 %1433
        %1435 = vrot.lane.b32.xlu0 %v265, 64
        %v1436 = vpop.permute.xlu0 %1435
        %1437 = vrot.lane.b32.xlu0 %v266, 64
        %v1438 = vpop.permute.xlu0 %1437
        %1439 = vrot.lane.b32.xlu0 %v267, 64
        %v1440 = vpop.permute.xlu0 %1439
        %1441 = vrot.lane.b32.xlu0 %v268, 64
        %v1442 = vpop.permute.xlu0 %1441
        %v1451 = vmul.bf16 %v237, %v1428
        %v1452 = vmul.bf16 %v238, %v1430
        %v1453 = vmul.bf16 %v239, %v1432
        %v1454 = vmul.bf16 %v240, %v1434
        %v1455 = vmul.bf16 %v241, %v1436
        %v1456 = vmul.bf16 %v242, %v1438
        %v1457 = vmul.bf16 %v243, %v1440
        %v1458 = vmul.bf16 %v244, %v1442
        %1459 = vrot.lane.b32.xlu0 %v320, 48
        %v1460 = vpop.permute.xlu0 %1459
        %1461 = vrot.lane.b32.xlu0 %v321, 48
        %v1462 = vpop.permute.xlu0 %1461
        %1463 = vrot.lane.b32.xlu0 %v322, 48
        %v1464 = vpop.permute.xlu0 %1463
        %1465 = vrot.lane.b32.xlu0 %v323, 48
        %v1466 = vpop.permute.xlu0 %1465
        %v1468 = vsel %vm340, %v1460, %v910
        %v1471 = vsel %vm340, %v1462, %v912
        %v1474 = vsel %vm340, %v1464, %v914
        %v1477 = vsel %vm340, %v1466, %v916
        %v1479 = vmul.bf16 %v1468, %v373
        %v1480 = vmul.bf16 %v1471, %v374
        %v1481 = vmul.bf16 %v1474, %v375
        %v1482 = vmul.bf16 %v1477, %v376
        %v1487 = vunpack.c.l.b16 %v1479
        %v1488 = vunpack.c.h.b16 %v1479
        %v1489 = vunpack.c.l.b16 %v1480
        %v1490 = vunpack.c.h.b16 %v1480
        %v1491 = vunpack.c.l.b16 %v1481
        %v1492 = vunpack.c.h.b16 %v1481
        %v1493 = vunpack.c.l.b16 %v1482
        %v1494 = vunpack.c.h.b16 %v1482
        %v1495 = vpack.c.b16 %v1487, %v1487
        %v1496 = vpack.c.b16 %v1488, %v1488
        %v1497 = vpack.c.b16 %v1489, %v1489
        %v1498 = vpack.c.b16 %v1490, %v1490
        %v1499 = vpack.c.b16 %v1491, %v1491
        %v1500 = vpack.c.b16 %v1492, %v1492
        %v1501 = vpack.c.b16 %v1493, %v1493
        %v1502 = vpack.c.b16 %v1494, %v1494
        %1503 = vrot.lane.b32.xlu0 %v1495, 64
        %v1504 = vpop.permute.xlu0 %1503
        %1505 = vrot.lane.b32.xlu0 %v1496, 64
        %v1506 = vpop.permute.xlu0 %1505
        %1507 = vrot.lane.b32.xlu0 %v1497, 64
        %v1508 = vpop.permute.xlu0 %1507
        %1509 = vrot.lane.b32.xlu0 %v1498, 64
        %v1510 = vpop.permute.xlu0 %1509
        %1511 = vrot.lane.b32.xlu0 %v1499, 64
        %v1512 = vpop.permute.xlu0 %1511
        %1513 = vrot.lane.b32.xlu0 %v1500, 64
        %v1514 = vpop.permute.xlu0 %1513
        %1515 = vrot.lane.b32.xlu0 %v1501, 64
        %v1516 = vpop.permute.xlu0 %1515
        %1517 = vrot.lane.b32.xlu0 %v1502, 64
        %v1518 = vpop.permute.xlu0 %1517
        %v1527 = vadd.bf16 %v1451, %v1504
        %v1528 = vadd.bf16 %v1452, %v1506
        %v1529 = vadd.bf16 %v1453, %v1508
        %v1530 = vadd.bf16 %v1454, %v1510
        %v1531 = vadd.bf16 %v1455, %v1512
        %v1532 = vadd.bf16 %v1456, %v1514
        %v1533 = vadd.bf16 %v1457, %v1516
        %v1534 = vadd.bf16 %v1458, %v1518
        %1535 = vrot.lane.b32.xlu0 %v279, 64
        %v1536 = vpop.permute.xlu0 %1535
        %1537 = vrot.lane.b32.xlu0 %v280, 64
        %v1538 = vpop.permute.xlu0 %1537
        %1539 = vrot.lane.b32.xlu0 %v281, 64
        %v1540 = vpop.permute.xlu0 %1539
        %1541 = vrot.lane.b32.xlu0 %v282, 64
        %v1542 = vpop.permute.xlu0 %1541
        %1543 = vrot.lane.b32.xlu0 %v283, 64
        %v1544 = vpop.permute.xlu0 %1543
        %1545 = vrot.lane.b32.xlu0 %v284, 64
        %v1546 = vpop.permute.xlu0 %1545
        %1547 = vrot.lane.b32.xlu0 %v285, 64
        %v1548 = vpop.permute.xlu0 %1547
        %1549 = vrot.lane.b32.xlu0 %v286, 64
        %v1550 = vpop.permute.xlu0 %1549
        %v1559 = vmul.bf16 %v245, %v1536
        %v1560 = vmul.bf16 %v246, %v1538
        %v1561 = vmul.bf16 %v247, %v1540
        %v1562 = vmul.bf16 %v248, %v1542
        %v1563 = vmul.bf16 %v249, %v1544
        %v1564 = vmul.bf16 %v250, %v1546
        %v1565 = vmul.bf16 %v251, %v1548
        %v1566 = vmul.bf16 %v252, %v1550
        %1567 = vrot.lane.b32.xlu0 %v445, 48
        %v1568 = vpop.permute.xlu0 %1567
        %1569 = vrot.lane.b32.xlu0 %v446, 48
        %v1570 = vpop.permute.xlu0 %1569
        %1571 = vrot.lane.b32.xlu0 %v447, 48
        %v1572 = vpop.permute.xlu0 %1571
        %1573 = vrot.lane.b32.xlu0 %v448, 48
        %v1574 = vpop.permute.xlu0 %1573
        %v1576 = vsel %vm340, %v1568, %v1026
        %v1579 = vsel %vm340, %v1570, %v1028
        %v1582 = vsel %vm340, %v1572, %v1030
        %v1585 = vsel %vm340, %v1574, %v1032
        %v1587 = vmul.bf16 %v1576, %v497
        %v1588 = vmul.bf16 %v1579, %v498
        %v1589 = vmul.bf16 %v1582, %v499
        %v1590 = vmul.bf16 %v1585, %v500
        %v1595 = vunpack.c.l.b16 %v1587
        %v1596 = vunpack.c.h.b16 %v1587
        %v1597 = vunpack.c.l.b16 %v1588
        %v1598 = vunpack.c.h.b16 %v1588
        %v1599 = vunpack.c.l.b16 %v1589
        %v1600 = vunpack.c.h.b16 %v1589
        %v1601 = vunpack.c.l.b16 %v1590
        %v1602 = vunpack.c.h.b16 %v1590
        %v1603 = vpack.c.b16 %v1595, %v1595
        %v1604 = vpack.c.b16 %v1596, %v1596
        %v1605 = vpack.c.b16 %v1597, %v1597
        %v1606 = vpack.c.b16 %v1598, %v1598
        %v1607 = vpack.c.b16 %v1599, %v1599
        %v1608 = vpack.c.b16 %v1600, %v1600
        %v1609 = vpack.c.b16 %v1601, %v1601
        %v1610 = vpack.c.b16 %v1602, %v1602
        %1611 = vrot.lane.b32.xlu0 %v1603, 64
        %v1612 = vpop.permute.xlu0 %1611
        %1613 = vrot.lane.b32.xlu0 %v1604, 64
        %v1614 = vpop.permute.xlu0 %1613
        %1615 = vrot.lane.b32.xlu0 %v1605, 64
        %v1616 = vpop.permute.xlu0 %1615
        %1617 = vrot.lane.b32.xlu0 %v1606, 64
        %v1618 = vpop.permute.xlu0 %1617
        %1619 = vrot.lane.b32.xlu0 %v1607, 64
        %v1620 = vpop.permute.xlu0 %1619
        %1621 = vrot.lane.b32.xlu0 %v1608, 64
        %v1622 = vpop.permute.xlu0 %1621
        %1623 = vrot.lane.b32.xlu0 %v1609, 64
        %v1624 = vpop.permute.xlu0 %1623
        %1625 = vrot.lane.b32.xlu0 %v1610, 64
        %v1626 = vpop.permute.xlu0 %1625
        %v1635 = vadd.bf16 %v1559, %v1612
        %v1636 = vadd.bf16 %v1560, %v1614
        %v1637 = vadd.bf16 %v1561, %v1616
        %v1638 = vadd.bf16 %v1562, %v1618
        %v1639 = vadd.bf16 %v1563, %v1620
        %v1640 = vadd.bf16 %v1564, %v1622
        %v1641 = vadd.bf16 %v1565, %v1624
        %v1642 = vadd.bf16 %v1566, %v1626
        %v1651 = vunpack.c.l.b16 %v1527
        %v1652 = vunpack.c.l.b16 %v1528
        %v1653 = vunpack.c.l.b16 %v1529
        %v1654 = vunpack.c.l.b16 %v1530
        %v1655 = vunpack.c.l.b16 %v1531
        %v1656 = vunpack.c.l.b16 %v1532
        %v1657 = vunpack.c.l.b16 %v1533
        %v1658 = vunpack.c.l.b16 %v1534
        %v1659 = vpack.c.b16 %v1652, %v1651
        %v1660 = vpack.c.b16 %v1654, %v1653
        %v1661 = vpack.c.b16 %v1656, %v1655
        %v1662 = vpack.c.b16 %v1658, %v1657
        %1663 = vrot.lane.b32.xlu0 %v1659, 64
        %v1664 = vpop.permute.xlu0 %1663
        %1665 = vrot.lane.b32.xlu0 %v1660, 64
        %v1666 = vpop.permute.xlu0 %1665
        %1667 = vrot.lane.b32.xlu0 %v1661, 64
        %v1668 = vpop.permute.xlu0 %1667
        %1669 = vrot.lane.b32.xlu0 %v1662, 64
        %v1670 = vpop.permute.xlu0 %1669
        %v1679 = vunpack.c.l.b16 %v1635
        %v1680 = vunpack.c.l.b16 %v1636
        %v1681 = vunpack.c.l.b16 %v1637
        %v1682 = vunpack.c.l.b16 %v1638
        %v1683 = vunpack.c.l.b16 %v1639
        %v1684 = vunpack.c.l.b16 %v1640
        %v1685 = vunpack.c.l.b16 %v1641
        %v1686 = vunpack.c.l.b16 %v1642
        %v1687 = vpack.c.b16 %v1680, %v1679
        %v1688 = vpack.c.b16 %v1682, %v1681
        %v1689 = vpack.c.b16 %v1684, %v1683
        %v1690 = vpack.c.b16 %v1686, %v1685
        %1691 = vrot.lane.b32.xlu0 %v1687, 64
        %v1692 = vpop.permute.xlu0 %1691
        %1693 = vrot.lane.b32.xlu0 %v1688, 64
        %v1694 = vpop.permute.xlu0 %1693
        %1695 = vrot.lane.b32.xlu0 %v1689, 64
        %v1696 = vpop.permute.xlu0 %1695
        %1697 = vrot.lane.b32.xlu0 %v1690, 64
        %v1698 = vpop.permute.xlu0 %1697
        %v1700 = vsel %vm585, %v1664, 0
        %v1703 = vsel %vm585, %v1666, 0
        %v1706 = vsel %vm585, %v1668, 0
        %v1709 = vsel %vm585, %v1670, 0
        %v1712 = vsel %vm585, %v1692, 0
        %v1715 = vsel %vm585, %v1694, 0
        %v1718 = vsel %vm585, %v1696, 0
        %v1721 = vsel %vm585, %v1698, 0
        %1723 = vmatprep.subr.bf16.mxu0 0
        %1724 = vmatpush1.bf16.xpose.msra.mxu0 %v1712
        %1725 = vmatprep.subr.bf16.mxu0 0
        %1726 = vmatpush1.bf16.xpose.msra.mxu0 %v1715
        %1727 = vmatprep.subr.bf16.mxu0 0
        %1728 = vmatpush1.bf16.xpose.msra.mxu0 %v1718
        %1729 = vmatprep.subr.bf16.mxu0 0
        %1730 = vmatpush1.bf16.xpose.msra.mxu0 %v1721
        %1731 = vmatprep.subr.bf16.mxu0 0
        %1732 = vmatpush1.bf16.xpose.msra.mxu0 0
        %1733 = vmatprep.subr.bf16.mxu0 0
        %1734 = vmatpush1.bf16.xpose.msra.mxu0 0
        %1735 = vmatprep.subr.bf16.mxu0 0
        %1736 = vmatpush1.bf16.xpose.msra.mxu0 0
        %1737 = vmatprep.subr.bf16.mxu0 0
        %1738 = vmatpush1.bf16.xpose.msra.mxu0 0
        %1739 = vmatprep.subr.bf16.mxu0 0
        %1740 = vmatpush1.bf16.xpose.msra.mxu0 0
        %1741 = vmatprep.subr.bf16.mxu0 0
        %1742 = vmatpush1.bf16.xpose.msra.mxu0 0
        %1743 = vmatprep.subr.bf16.mxu0 0
        %1744 = vmatpush1.bf16.xpose.msra.mxu0 0
        %1745 = vmatprep.subr.bf16.mxu0 0
        %1746 = vmatpush1.bf16.xpose.msra.mxu0 0
        %1747 = vmatprep.subr.bf16.mxu0 0
        %1748 = vmatpush1.bf16.xpose.msra.mxu0 0
        %1749 = vmatprep.subr.bf16.mxu0 0
        %1750 = vmatpush1.bf16.xpose.msra.mxu0 0
        %1751 = vmatprep.subr.bf16.mxu0 0
        %1752 = vmatpush1.bf16.xpose.msra.mxu0 0
        %1753 = vmatprep.subr.bf16.mxu0 0
        %1754 = vmatpush1.bf16.xpose.msra.mxu0 0
        %1755 = vmatprep.mubr.bf16.mxu0 0
        %1756 = vmatmul.mubr.bf16.gmra.mrb[0].mxu0 %v1700
        %v1757 = vpop.f32.mrb[0].mxu0
        %v1758 = vadd.f32 0.0, %v1757
        %v1759 = vpop.f32.mrb[0].mxu0
        %v1760 = vpop.f32.mrb[0].mxu0
        %v1761 = vadd.f32 0.0, %v1760
        %v1762 = vpop.f32.mrb[0].mxu0
        %1763 = vmatprep.mubr.bf16.mxu0 0
        %1764 = vmatmul.mubr.bf16.gmra.mrb[0].mxu0 %v1703
        %v1765 = vpop.f32.mrb[0].mxu0
        %v1766 = vadd.f32 0.0, %v1765
        %v1767 = vpop.f32.mrb[0].mxu0
        %v1768 = vpop.f32.mrb[0].mxu0
        %v1769 = vadd.f32 0.0, %v1768
        %v1770 = vpop.f32.mrb[0].mxu0
        %1771 = vmatprep.mubr.bf16.mxu0 0
        %1772 = vmatmul.mubr.bf16.gmra.mrb[0].mxu0 %v1706
        %v1773 = vpop.f32.mrb[0].mxu0
        %v1774 = vadd.f32 0.0, %v1773
        %v1775 = vpop.f32.mrb[0].mxu0
        %v1776 = vpop.f32.mrb[0].mxu0
        %v1777 = vadd.f32 0.0, %v1776
        %v1778 = vpop.f32.mrb[0].mxu0
        %1779 = vmatprep.mubr.bf16.mxu0 0
        %1780 = vmatmul.mubr.bf16.gmra.mrb[0].mxu0 %v1709
        %v1781 = vpop.f32.mrb[0].mxu0
        %v1782 = vadd.f32 0.0, %v1781
        %v1783 = vpop.f32.mrb[0].mxu0
        %v1784 = vpop.f32.mrb[0].mxu0
        %v1785 = vadd.f32 0.0, %v1784
        %v1786 = vpop.f32.mrb[0].mxu0
        %1787 = vdwg.mxu0
        %v1788 = vsel %vm675, %v1758, -inf
        %1789 = vmax.xlane.f32.xlu0 %v1788
        %v1790 = vpop.xlane.xlu0 %1789
        %v1791 = vsel %vm675, %v1761, -inf
        %1792 = vmax.xlane.f32.xlu0 %v1791
        %v1793 = vpop.xlane.xlu0 %1792
        %v1794 = vsel %vm675, %v1766, -inf
        %1795 = vmax.xlane.f32.xlu0 %v1794
        %v1796 = vpop.xlane.xlu0 %1795
        %v1797 = vsel %vm675, %v1769, -inf
        %1798 = vmax.xlane.f32.xlu0 %v1797
        %v1799 = vpop.xlane.xlu0 %1798
        %v1800 = vsel %vm675, %v1774, -inf
        %1801 = vmax.xlane.f32.xlu0 %v1800
        %v1802 = vpop.xlane.xlu0 %1801
        %v1803 = vsel %vm675, %v1777, -inf
        %1804 = vmax.xlane.f32.xlu0 %v1803
        %v1805 = vpop.xlane.xlu0 %1804
        %v1806 = vsel %vm675, %v1782, -inf
        %1807 = vmax.xlane.f32.xlu0 %v1806
        %v1808 = vpop.xlane.xlu0 %1807
        %v1809 = vsel %vm675, %v1785, -inf
        %1810 = vmax.xlane.f32.xlu0 %v1809
        %v1811 = vpop.xlane.xlu0 %1810
        %v1812 = vsub.f32 %v1758, %v1790
        %v1813 = vsub.f32 %v1761, %v1793
        %v1814 = vsub.f32 %v1766, %v1796
        %v1815 = vsub.f32 %v1769, %v1799
        %v1816 = vsub.f32 %v1774, %v1802
        %v1817 = vsub.f32 %v1777, %v1805
        %v1818 = vsub.f32 %v1782, %v1808
        %v1819 = vsub.f32 %v1785, %v1811
        %v1820 = vmul.f32 %v1812, 1.442695
        %v1821 = vpow.pop %v1820
        %v1822 = vmul.f32 %v1813, 1.442695
        %v1823 = vpow.pop %v1822
        %v1824 = vmul.f32 %v1814, 1.442695
        %v1825 = vpow.pop %v1824
        %v1826 = vmul.f32 %v1815, 1.442695
        %v1827 = vpow.pop %v1826
        %v1828 = vmul.f32 %v1816, 1.442695
        %v1829 = vpow.pop %v1828
        %v1830 = vmul.f32 %v1817, 1.442695
        %v1831 = vpow.pop %v1830
        %v1832 = vmul.f32 %v1818, 1.442695
        %v1833 = vpow.pop %v1832
        %v1834 = vmul.f32 %v1819, 1.442695
        %v1835 = vpow.pop %v1834
        %v1836 = vsel %vm675, %v1821, 0.0
        %1837 = vadd.xlane.f32.xlu0 %v1836
        %v1838 = vpop.xlane.xlu0 %1837
        %v1839 = vsel %vm675, %v1823, 0.0
        %1840 = vadd.xlane.f32.xlu0 %v1839
        %v1841 = vpop.xlane.xlu0 %1840
        %v1842 = vsel %vm675, %v1825, 0.0
        %1843 = vadd.xlane.f32.xlu0 %v1842
        %v1844 = vpop.xlane.xlu0 %1843
        %v1845 = vsel %vm675, %v1827, 0.0
        %1846 = vadd.xlane.f32.xlu0 %v1845
        %v1847 = vpop.xlane.xlu0 %1846
        %v1848 = vsel %vm675, %v1829, 0.0
        %1849 = vadd.xlane.f32.xlu0 %v1848
        %v1850 = vpop.xlane.xlu0 %1849
        %v1851 = vsel %vm675, %v1831, 0.0
        %1852 = vadd.xlane.f32.xlu0 %v1851
        %v1853 = vpop.xlane.xlu0 %1852
        %v1854 = vsel %vm675, %v1833, 0.0
        %1855 = vadd.xlane.f32.xlu0 %v1854
        %v1856 = vpop.xlane.xlu0 %1855
        %v1857 = vsel %vm675, %v1835, 0.0
        %1858 = vadd.xlane.f32.xlu0 %v1857
        %v1859 = vpop.xlane.xlu0 %1858
        %v1860 = vpack.c.bf16 %v1823, %v1821
        %v1861 = vpack.c.bf16 %v1827, %v1825
        %v1862 = vpack.c.bf16 %v1831, %v1829
        %v1863 = vpack.c.bf16 %v1835, %v1833
        %1864 = vrot.lane.b32.xlu0 %v768, 64
        %v1865 = vpop.permute.xlu0 %1864
        %1866 = vrot.lane.b32.xlu0 %v769, 64
        %v1867 = vpop.permute.xlu0 %1866
        %1868 = vrot.lane.b32.xlu0 %v770, 64
        %v1869 = vpop.permute.xlu0 %1868
        %1870 = vrot.lane.b32.xlu0 %v771, 64
        %v1871 = vpop.permute.xlu0 %1870
        %v1877 = vsel %vm675, %v1860, 0
        %v1880 = vsel %vm675, %v1861, 0
        %v1883 = vsel %vm675, %v1862, 0
        %v1886 = vsel %vm675, %v1863, 0
        %1888 = vmatprep.subr.bf16.mxu0 0
        %1889 = vmatpush1.bf16.msra.mxu0 %v1865
        %1890 = vmatprep.subr.bf16.mxu0 0
        %1891 = vmatpush1.bf16.msra.mxu0 %v1867
        %1892 = vmatprep.subr.bf16.mxu0 0
        %1893 = vmatpush1.bf16.msra.mxu0 %v1869
        %1894 = vmatprep.subr.bf16.mxu0 0
        %1895 = vmatpush1.bf16.msra.mxu0 %v1871
        %1896 = vmatprep.subr.bf16.mxu0 0
        %1897 = vmatpush1.bf16.msra.mxu0 0
        %1898 = vmatprep.subr.bf16.mxu0 0
        %1899 = vmatpush1.bf16.msra.mxu0 0
        %1900 = vmatprep.subr.bf16.mxu0 0
        %1901 = vmatpush1.bf16.msra.mxu0 0
        %1902 = vmatprep.subr.bf16.mxu0 0
        %1903 = vmatpush1.bf16.msra.mxu0 0
        %1904 = vmatprep.subr.bf16.mxu0 0
        %1905 = vmatpush1.bf16.msra.mxu0 0
        %1906 = vmatprep.subr.bf16.mxu0 0
        %1907 = vmatpush1.bf16.msra.mxu0 0
        %1908 = vmatprep.subr.bf16.mxu0 0
        %1909 = vmatpush1.bf16.msra.mxu0 0
        %1910 = vmatprep.subr.bf16.mxu0 0
        %1911 = vmatpush1.bf16.msra.mxu0 0
        %1912 = vmatprep.subr.bf16.mxu0 0
        %1913 = vmatpush1.bf16.msra.mxu0 0
        %1914 = vmatprep.subr.bf16.mxu0 0
        %1915 = vmatpush1.bf16.msra.mxu0 0
        %1916 = vmatprep.subr.bf16.mxu0 0
        %1917 = vmatpush1.bf16.msra.mxu0 0
        %1918 = vmatprep.subr.bf16.mxu0 0
        %1919 = vmatpush1.bf16.msra.mxu0 0
        %1920 = vmatprep.mubr.bf16.mxu0 0
        %1921 = vmatmul.mubr.bf16.gmra.mrb[0].mxu0 %v1877
        %v1922 = vpop.f32.mrb[0].mxu0
        %v1923 = vadd.f32 0.0, %v1922
        %v1924 = vpop.f32.mrb[0].mxu0
        %v1925 = vpop.f32.mrb[0].mxu0
        %v1926 = vadd.f32 0.0, %v1925
        %v1927 = vpop.f32.mrb[0].mxu0
        %1928 = vmatprep.mubr.bf16.mxu0 0
        %1929 = vmatmul.mubr.bf16.gmra.mrb[0].mxu0 %v1880
        %v1930 = vpop.f32.mrb[0].mxu0
        %v1931 = vadd.f32 0.0, %v1930
        %v1932 = vpop.f32.mrb[0].mxu0
        %v1933 = vpop.f32.mrb[0].mxu0
        %v1934 = vadd.f32 0.0, %v1933
        %v1935 = vpop.f32.mrb[0].mxu0
        %1936 = vmatprep.mubr.bf16.mxu0 0
        %1937 = vmatmul.mubr.bf16.gmra.mrb[0].mxu0 %v1883
        %v1938 = vpop.f32.mrb[0].mxu0
        %v1939 = vadd.f32 0.0, %v1938
        %v1940 = vpop.f32.mrb[0].mxu0
        %v1941 = vpop.f32.mrb[0].mxu0
        %v1942 = vadd.f32 0.0, %v1941
        %v1943 = vpop.f32.mrb[0].mxu0
        %1944 = vmatprep.mubr.bf16.mxu0 0
        %1945 = vmatmul.mubr.bf16.gmra.mrb[0].mxu0 %v1886
        %v1946 = vpop.f32.mrb[0].mxu0
        %v1947 = vadd.f32 0.0, %v1946
        %v1948 = vpop.f32.mrb[0].mxu0
        %v1949 = vpop.f32.mrb[0].mxu0
        %v1950 = vadd.f32 0.0, %v1949
        %v1951 = vpop.f32.mrb[0].mxu0
        %1952 = vdwg.mxu0
        %v1953 = vrcp.pop %v1838
        %v1954 = vrcp.pop %v1841
        %v1955 = vrcp.pop %v1844
        %v1956 = vrcp.pop %v1847
        %v1957 = vrcp.pop %v1850
        %v1958 = vrcp.pop %v1853
        %v1959 = vrcp.pop %v1856
        %v1960 = vrcp.pop %v1859
        %v1961 = vmul.f32 %v1923, %v1953
        %v1962 = vmul.f32 %v1926, %v1954
        %v1963 = vmul.f32 %v1931, %v1955
        %v1964 = vmul.f32 %v1934, %v1956
        %v1965 = vmul.f32 %v1939, %v1957
        %v1966 = vmul.f32 %v1942, %v1958
        %v1967 = vmul.f32 %v1947, %v1959
        %v1968 = vmul.f32 %v1950, %v1960
        %1969 = vrot.lane.b32.xlu0 %v261, 96
        %v1970 = vpop.permute.xlu0 %1969
        %1971 = vrot.lane.b32.xlu0 %v262, 96
        %v1972 = vpop.permute.xlu0 %1971
        %1973 = vrot.lane.b32.xlu0 %v263, 96
        %v1974 = vpop.permute.xlu0 %1973
        %1975 = vrot.lane.b32.xlu0 %v264, 96
        %v1976 = vpop.permute.xlu0 %1975
        %1977 = vrot.lane.b32.xlu0 %v265, 96
        %v1978 = vpop.permute.xlu0 %1977
        %1979 = vrot.lane.b32.xlu0 %v266, 96
        %v1980 = vpop.permute.xlu0 %1979
        %1981 = vrot.lane.b32.xlu0 %v267, 96
        %v1982 = vpop.permute.xlu0 %1981
        %1983 = vrot.lane.b32.xlu0 %v268, 96
        %v1984 = vpop.permute.xlu0 %1983
        %v1993 = vmul.bf16 %v237, %v1970
        %v1994 = vmul.bf16 %v238, %v1972
        %v1995 = vmul.bf16 %v239, %v1974
        %v1996 = vmul.bf16 %v240, %v1976
        %v1997 = vmul.bf16 %v241, %v1978
        %v1998 = vmul.bf16 %v242, %v1980
        %v1999 = vmul.bf16 %v243, %v1982
        %v2000 = vmul.bf16 %v244, %v1984
        %v2001 = vsel %vm340, %v333, %v1460
        %v2003 = vsel %vm340, %v335, %v1462
        %v2005 = vsel %vm340, %v337, %v1464
        %v2007 = vsel %vm340, %v339, %v1466
        %v2009 = vmul.bf16 %v2001, %v373
        %v2010 = vmul.bf16 %v2003, %v374
        %v2011 = vmul.bf16 %v2005, %v375
        %v2012 = vmul.bf16 %v2007, %v376
        %v2017 = vunpack.c.l.b16 %v2009
        %v2018 = vunpack.c.h.b16 %v2009
        %v2019 = vunpack.c.l.b16 %v2010
        %v2020 = vunpack.c.h.b16 %v2010
        %v2021 = vunpack.c.l.b16 %v2011
        %v2022 = vunpack.c.h.b16 %v2011
        %v2023 = vunpack.c.l.b16 %v2012
        %v2024 = vunpack.c.h.b16 %v2012
        %v2025 = vpack.c.b16 %v2017, %v2017
        %v2026 = vpack.c.b16 %v2018, %v2018
        %v2027 = vpack.c.b16 %v2019, %v2019
        %v2028 = vpack.c.b16 %v2020, %v2020
        %v2029 = vpack.c.b16 %v2021, %v2021
        %v2030 = vpack.c.b16 %v2022, %v2022
        %v2031 = vpack.c.b16 %v2023, %v2023
        %v2032 = vpack.c.b16 %v2024, %v2024
        %2033 = vrot.lane.b32.xlu0 %v2025, 96
        %v2034 = vpop.permute.xlu0 %2033
        %2035 = vrot.lane.b32.xlu0 %v2026, 96
        %v2036 = vpop.permute.xlu0 %2035
        %2037 = vrot.lane.b32.xlu0 %v2027, 96
        %v2038 = vpop.permute.xlu0 %2037
        %2039 = vrot.lane.b32.xlu0 %v2028, 96
        %v2040 = vpop.permute.xlu0 %2039
        %2041 = vrot.lane.b32.xlu0 %v2029, 96
        %v2042 = vpop.permute.xlu0 %2041
        %2043 = vrot.lane.b32.xlu0 %v2030, 96
        %v2044 = vpop.permute.xlu0 %2043
        %2045 = vrot.lane.b32.xlu0 %v2031, 96
        %v2046 = vpop.permute.xlu0 %2045
        %2047 = vrot.lane.b32.xlu0 %v2032, 96
        %v2048 = vpop.permute.xlu0 %2047
        %v2057 = vadd.bf16 %v1993, %v2034
        %v2058 = vadd.bf16 %v1994, %v2036
        %v2059 = vadd.bf16 %v1995, %v2038
        %v2060 = vadd.bf16 %v1996, %v2040
        %v2061 = vadd.bf16 %v1997, %v2042
        %v2062 = vadd.bf16 %v1998, %v2044
        %v2063 = vadd.bf16 %v1999, %v2046
        %v2064 = vadd.bf16 %v2000, %v2048
        %2065 = vrot.lane.b32.xlu0 %v279, 96
        %v2066 = vpop.permute.xlu0 %2065
        %2067 = vrot.lane.b32.xlu0 %v280, 96
        %v2068 = vpop.permute.xlu0 %2067
        %2069 = vrot.lane.b32.xlu0 %v281, 96
        %v2070 = vpop.permute.xlu0 %2069
        %2071 = vrot.lane.b32.xlu0 %v282, 96
        %v2072 = vpop.permute.xlu0 %2071
        %2073 = vrot.lane.b32.xlu0 %v283, 96
        %v2074 = vpop.permute.xlu0 %2073
        %2075 = vrot.lane.b32.xlu0 %v284, 96
        %v2076 = vpop.permute.xlu0 %2075
        %2077 = vrot.lane.b32.xlu0 %v285, 96
        %v2078 = vpop.permute.xlu0 %2077
        %2079 = vrot.lane.b32.xlu0 %v286, 96
        %v2080 = vpop.permute.xlu0 %2079
        %v2089 = vmul.bf16 %v245, %v2066
        %v2090 = vmul.bf16 %v246, %v2068
        %v2091 = vmul.bf16 %v247, %v2070
        %v2092 = vmul.bf16 %v248, %v2072
        %v2093 = vmul.bf16 %v249, %v2074
        %v2094 = vmul.bf16 %v250, %v2076
        %v2095 = vmul.bf16 %v251, %v2078
        %v2096 = vmul.bf16 %v252, %v2080
        %v2097 = vsel %vm340, %v458, %v1568
        %v2099 = vsel %vm340, %v460, %v1570
        %v2101 = vsel %vm340, %v462, %v1572
        %v2103 = vsel %vm340, %v464, %v1574
        %v2105 = vmul.bf16 %v2097, %v497
        %v2106 = vmul.bf16 %v2099, %v498
        %v2107 = vmul.bf16 %v2101, %v499
        %v2108 = vmul.bf16 %v2103, %v500
        %v2113 = vunpack.c.l.b16 %v2105
        %v2114 = vunpack.c.h.b16 %v2105
        %v2115 = vunpack.c.l.b16 %v2106
        %v2116 = vunpack.c.h.b16 %v2106
        %v2117 = vunpack.c.l.b16 %v2107
        %v2118 = vunpack.c.h.b16 %v2107
        %v2119 = vunpack.c.l.b16 %v2108
        %v2120 = vunpack.c.h.b16 %v2108
        %v2121 = vpack.c.b16 %v2113, %v2113
        %v2122 = vpack.c.b16 %v2114, %v2114
        %v2123 = vpack.c.b16 %v2115, %v2115
        %v2124 = vpack.c.b16 %v2116, %v2116
        %v2125 = vpack.c.b16 %v2117, %v2117
        %v2126 = vpack.c.b16 %v2118, %v2118
        %v2127 = vpack.c.b16 %v2119, %v2119
        %v2128 = vpack.c.b16 %v2120, %v2120
        %2129 = vrot.lane.b32.xlu0 %v2121, 96
        %v2130 = vpop.permute.xlu0 %2129
        %2131 = vrot.lane.b32.xlu0 %v2122, 96
        %v2132 = vpop.permute.xlu0 %2131
        %2133 = vrot.lane.b32.xlu0 %v2123, 96
        %v2134 = vpop.permute.xlu0 %2133
        %2135 = vrot.lane.b32.xlu0 %v2124, 96
        %v2136 = vpop.permute.xlu0 %2135
        %2137 = vrot.lane.b32.xlu0 %v2125, 96
        %v2138 = vpop.permute.xlu0 %2137
        %2139 = vrot.lane.b32.xlu0 %v2126, 96
        %v2140 = vpop.permute.xlu0 %2139
        %2141 = vrot.lane.b32.xlu0 %v2127, 96
        %v2142 = vpop.permute.xlu0 %2141
        %2143 = vrot.lane.b32.xlu0 %v2128, 96
        %v2144 = vpop.permute.xlu0 %2143
        %v2153 = vadd.bf16 %v2089, %v2130
        %v2154 = vadd.bf16 %v2090, %v2132
        %v2155 = vadd.bf16 %v2091, %v2134
        %v2156 = vadd.bf16 %v2092, %v2136
        %v2157 = vadd.bf16 %v2093, %v2138
        %v2158 = vadd.bf16 %v2094, %v2140
        %v2159 = vadd.bf16 %v2095, %v2142
        %v2160 = vadd.bf16 %v2096, %v2144
        %v2169 = vunpack.c.l.b16 %v2057
        %v2170 = vunpack.c.l.b16 %v2058
        %v2171 = vunpack.c.l.b16 %v2059
        %v2172 = vunpack.c.l.b16 %v2060
        %v2173 = vunpack.c.l.b16 %v2061
        %v2174 = vunpack.c.l.b16 %v2062
        %v2175 = vunpack.c.l.b16 %v2063
        %v2176 = vunpack.c.l.b16 %v2064
        %v2177 = vpack.c.b16 %v2170, %v2169
        %v2178 = vpack.c.b16 %v2172, %v2171
        %v2179 = vpack.c.b16 %v2174, %v2173
        %v2180 = vpack.c.b16 %v2176, %v2175
        %2181 = vrot.lane.b32.xlu0 %v2177, 32
        %v2182 = vpop.permute.xlu0 %2181
        %2183 = vrot.lane.b32.xlu0 %v2178, 32
        %v2184 = vpop.permute.xlu0 %2183
        %2185 = vrot.lane.b32.xlu0 %v2179, 32
        %v2186 = vpop.permute.xlu0 %2185
        %2187 = vrot.lane.b32.xlu0 %v2180, 32
        %v2188 = vpop.permute.xlu0 %2187
        %v2197 = vunpack.c.l.b16 %v2153
        %v2198 = vunpack.c.l.b16 %v2154
        %v2199 = vunpack.c.l.b16 %v2155
        %v2200 = vunpack.c.l.b16 %v2156
        %v2201 = vunpack.c.l.b16 %v2157
        %v2202 = vunpack.c.l.b16 %v2158
        %v2203 = vunpack.c.l.b16 %v2159
        %v2204 = vunpack.c.l.b16 %v2160
        %v2205 = vpack.c.b16 %v2198, %v2197
        %v2206 = vpack.c.b16 %v2200, %v2199
        %v2207 = vpack.c.b16 %v2202, %v2201
        %v2208 = vpack.c.b16 %v2204, %v2203
        %2209 = vrot.lane.b32.xlu0 %v2205, 32
        %v2210 = vpop.permute.xlu0 %2209
        %2211 = vrot.lane.b32.xlu0 %v2206, 32
        %v2212 = vpop.permute.xlu0 %2211
        %2213 = vrot.lane.b32.xlu0 %v2207, 32
        %v2214 = vpop.permute.xlu0 %2213
        %2215 = vrot.lane.b32.xlu0 %v2208, 32
        %v2216 = vpop.permute.xlu0 %2215
        %v2218 = vsel %vm585, %v2182, 0
        %v2221 = vsel %vm585, %v2184, 0
        %v2224 = vsel %vm585, %v2186, 0
        %v2227 = vsel %vm585, %v2188, 0
        %v2230 = vsel %vm585, %v2210, 0
        %v2233 = vsel %vm585, %v2212, 0
        %v2236 = vsel %vm585, %v2214, 0
        %v2239 = vsel %vm585, %v2216, 0
        %2241 = vmatprep.subr.bf16.mxu0 0
        %2242 = vmatpush1.bf16.xpose.msra.mxu0 %v2230
        %2243 = vmatprep.subr.bf16.mxu0 0
        %2244 = vmatpush1.bf16.xpose.msra.mxu0 %v2233
        %2245 = vmatprep.subr.bf16.mxu0 0
        %2246 = vmatpush1.bf16.xpose.msra.mxu0 %v2236
        %2247 = vmatprep.subr.bf16.mxu0 0
        %2248 = vmatpush1.bf16.xpose.msra.mxu0 %v2239
        %2249 = vmatprep.subr.bf16.mxu0 0
        %2250 = vmatpush1.bf16.xpose.msra.mxu0 0
        %2251 = vmatprep.subr.bf16.mxu0 0
        %2252 = vmatpush1.bf16.xpose.msra.mxu0 0
        %2253 = vmatprep.subr.bf16.mxu0 0
        %2254 = vmatpush1.bf16.xpose.msra.mxu0 0
        %2255 = vmatprep.subr.bf16.mxu0 0
        %2256 = vmatpush1.bf16.xpose.msra.mxu0 0
        %2257 = vmatprep.subr.bf16.mxu0 0
        %2258 = vmatpush1.bf16.xpose.msra.mxu0 0
        %2259 = vmatprep.subr.bf16.mxu0 0
        %2260 = vmatpush1.bf16.xpose.msra.mxu0 0
        %2261 = vmatprep.subr.bf16.mxu0 0
        %2262 = vmatpush1.bf16.xpose.msra.mxu0 0
        %2263 = vmatprep.subr.bf16.mxu0 0
        %2264 = vmatpush1.bf16.xpose.msra.mxu0 0
        %2265 = vmatprep.subr.bf16.mxu0 0
        %2266 = vmatpush1.bf16.xpose.msra.mxu0 0
        %2267 = vmatprep.subr.bf16.mxu0 0
        %2268 = vmatpush1.bf16.xpose.msra.mxu0 0
        %2269 = vmatprep.subr.bf16.mxu0 0
        %2270 = vmatpush1.bf16.xpose.msra.mxu0 0
        %2271 = vmatprep.subr.bf16.mxu0 0
        %2272 = vmatpush1.bf16.xpose.msra.mxu0 0
        %2273 = vmatprep.mubr.bf16.mxu0 0
        %2274 = vmatmul.mubr.bf16.gmra.mrb[0].mxu0 %v2218
        %v2275 = vpop.f32.mrb[0].mxu0
        %v2276 = vadd.f32 0.0, %v2275
        %v2277 = vpop.f32.mrb[0].mxu0
        %v2278 = vpop.f32.mrb[0].mxu0
        %v2279 = vadd.f32 0.0, %v2278
        %v2280 = vpop.f32.mrb[0].mxu0
        %2281 = vmatprep.mubr.bf16.mxu0 0
        %2282 = vmatmul.mubr.bf16.gmra.mrb[0].mxu0 %v2221
        %v2283 = vpop.f32.mrb[0].mxu0
        %v2284 = vadd.f32 0.0, %v2283
        %v2285 = vpop.f32.mrb[0].mxu0
        %v2286 = vpop.f32.mrb[0].mxu0
        %v2287 = vadd.f32 0.0, %v2286
        %v2288 = vpop.f32.mrb[0].mxu0
        %2289 = vmatprep.mubr.bf16.mxu0 0
        %2290 = vmatmul.mubr.bf16.gmra.mrb[0].mxu0 %v2224
        %v2291 = vpop.f32.mrb[0].mxu0
        %v2292 = vadd.f32 0.0, %v2291
        %v2293 = vpop.f32.mrb[0].mxu0
        %v2294 = vpop.f32.mrb[0].mxu0
        %v2295 = vadd.f32 0.0, %v2294
        %v2296 = vpop.f32.mrb[0].mxu0
        %2297 = vmatprep.mubr.bf16.mxu0 0
        %2298 = vmatmul.mubr.bf16.gmra.mrb[0].mxu0 %v2227
        %v2299 = vpop.f32.mrb[0].mxu0
        %v2300 = vadd.f32 0.0, %v2299
        %v2301 = vpop.f32.mrb[0].mxu0
        %v2302 = vpop.f32.mrb[0].mxu0
        %v2303 = vadd.f32 0.0, %v2302
        %v2304 = vpop.f32.mrb[0].mxu0
        %2305 = vdwg.mxu0
        %v2306 = vsel %vm675, %v2276, -inf
        %2307 = vmax.xlane.f32.xlu0 %v2306
        %v2308 = vpop.xlane.xlu0 %2307
        %v2309 = vsel %vm675, %v2279, -inf
        %2310 = vmax.xlane.f32.xlu0 %v2309
        %v2311 = vpop.xlane.xlu0 %2310
        %v2312 = vsel %vm675, %v2284, -inf
        %2313 = vmax.xlane.f32.xlu0 %v2312
        %v2314 = vpop.xlane.xlu0 %2313
        %v2315 = vsel %vm675, %v2287, -inf
        %2316 = vmax.xlane.f32.xlu0 %v2315
        %v2317 = vpop.xlane.xlu0 %2316
        %v2318 = vsel %vm675, %v2292, -inf
        %2319 = vmax.xlane.f32.xlu0 %v2318
        %v2320 = vpop.xlane.xlu0 %2319
        %v2321 = vsel %vm675, %v2295, -inf
        %2322 = vmax.xlane.f32.xlu0 %v2321
        %v2323 = vpop.xlane.xlu0 %2322
        %v2324 = vsel %vm675, %v2300, -inf
        %2325 = vmax.xlane.f32.xlu0 %v2324
        %v2326 = vpop.xlane.xlu0 %2325
        %v2327 = vsel %vm675, %v2303, -inf
        %2328 = vmax.xlane.f32.xlu0 %v2327
        %v2329 = vpop.xlane.xlu0 %2328
        %v2330 = vsub.f32 %v2276, %v2308
        %v2331 = vsub.f32 %v2279, %v2311
        %v2332 = vsub.f32 %v2284, %v2314
        %v2333 = vsub.f32 %v2287, %v2317
        %v2334 = vsub.f32 %v2292, %v2320
        %v2335 = vsub.f32 %v2295, %v2323
        %v2336 = vsub.f32 %v2300, %v2326
        %v2337 = vsub.f32 %v2303, %v2329
        %v2338 = vmul.f32 %v2330, 1.442695
        %v2339 = vpow.pop %v2338
        %v2340 = vmul.f32 %v2331, 1.442695
        %v2341 = vpow.pop %v2340
        %v2342 = vmul.f32 %v2332, 1.442695
        %v2343 = vpow.pop %v2342
        %v2344 = vmul.f32 %v2333, 1.442695
        %v2345 = vpow.pop %v2344
        %v2346 = vmul.f32 %v2334, 1.442695
        %v2347 = vpow.pop %v2346
        %v2348 = vmul.f32 %v2335, 1.442695
        %v2349 = vpow.pop %v2348
        %v2350 = vmul.f32 %v2336, 1.442695
        %v2351 = vpow.pop %v2350
        %v2352 = vmul.f32 %v2337, 1.442695
        %v2353 = vpow.pop %v2352
        %v2354 = vsel %vm675, %v2339, 0.0
        %2355 = vadd.xlane.f32.xlu0 %v2354
        %v2356 = vpop.xlane.xlu0 %2355
        %v2357 = vsel %vm675, %v2341, 0.0
        %2358 = vadd.xlane.f32.xlu0 %v2357
        %v2359 = vpop.xlane.xlu0 %2358
        %v2360 = vsel %vm675, %v2343, 0.0
        %2361 = vadd.xlane.f32.xlu0 %v2360
        %v2362 = vpop.xlane.xlu0 %2361
        %v2363 = vsel %vm675, %v2345, 0.0
        %2364 = vadd.xlane.f32.xlu0 %v2363
        %v2365 = vpop.xlane.xlu0 %2364
        %v2366 = vsel %vm675, %v2347, 0.0
        %2367 = vadd.xlane.f32.xlu0 %v2366
        %v2368 = vpop.xlane.xlu0 %2367
        %v2369 = vsel %vm675, %v2349, 0.0
        %2370 = vadd.xlane.f32.xlu0 %v2369
        %v2371 = vpop.xlane.xlu0 %2370
        %v2372 = vsel %vm675, %v2351, 0.0
        %2373 = vadd.xlane.f32.xlu0 %v2372
        %v2374 = vpop.xlane.xlu0 %2373
        %v2375 = vsel %vm675, %v2353, 0.0
        %2376 = vadd.xlane.f32.xlu0 %v2375
        %v2377 = vpop.xlane.xlu0 %2376
        %v2378 = vpack.c.bf16 %v2341, %v2339
        %v2379 = vpack.c.bf16 %v2345, %v2343
        %v2380 = vpack.c.bf16 %v2349, %v2347
        %v2381 = vpack.c.bf16 %v2353, %v2351
        %2382 = vrot.lane.b32.xlu0 %v768, 32
        %v2383 = vpop.permute.xlu0 %2382
        %2384 = vrot.lane.b32.xlu0 %v769, 32
        %v2385 = vpop.permute.xlu0 %2384
        %2386 = vrot.lane.b32.xlu0 %v770, 32
        %v2387 = vpop.permute.xlu0 %2386
        %2388 = vrot.lane.b32.xlu0 %v771, 32
        %v2389 = vpop.permute.xlu0 %2388
        %v2395 = vsel %vm675, %v2378, 0
        %v2398 = vsel %vm675, %v2379, 0
        %v2401 = vsel %vm675, %v2380, 0
        %v2404 = vsel %vm675, %v2381, 0
        %2406 = vmatprep.subr.bf16.mxu0 0
        %2407 = vmatpush1.bf16.msra.mxu0 %v2383
        %2408 = vmatprep.subr.bf16.mxu0 0
        %2409 = vmatpush1.bf16.msra.mxu0 %v2385
        %2410 = vmatprep.subr.bf16.mxu0 0
        %2411 = vmatpush1.bf16.msra.mxu0 %v2387
        %2412 = vmatprep.subr.bf16.mxu0 0
        %2413 = vmatpush1.bf16.msra.mxu0 %v2389
        %2414 = vmatprep.subr.bf16.mxu0 0
        %2415 = vmatpush1.bf16.msra.mxu0 0
        %2416 = vmatprep.subr.bf16.mxu0 0
        %2417 = vmatpush1.bf16.msra.mxu0 0
        %2418 = vmatprep.subr.bf16.mxu0 0
        %2419 = vmatpush1.bf16.msra.mxu0 0
        %2420 = vmatprep.subr.bf16.mxu0 0
        %2421 = vmatpush1.bf16.msra.mxu0 0
        %2422 = vmatprep.subr.bf16.mxu0 0
        %2423 = vmatpush1.bf16.msra.mxu0 0
        %2424 = vmatprep.subr.bf16.mxu0 0
        %2425 = vmatpush1.bf16.msra.mxu0 0
        %2426 = vmatprep.subr.bf16.mxu0 0
        %2427 = vmatpush1.bf16.msra.mxu0 0
        %2428 = vmatprep.subr.bf16.mxu0 0
        %2429 = vmatpush1.bf16.msra.mxu0 0
        %2430 = vmatprep.subr.bf16.mxu0 0
        %2431 = vmatpush1.bf16.msra.mxu0 0
        %2432 = vmatprep.subr.bf16.mxu0 0
        %2433 = vmatpush1.bf16.msra.mxu0 0
        %2434 = vmatprep.subr.bf16.mxu0 0
        %2435 = vmatpush1.bf16.msra.mxu0 0
        %2436 = vmatprep.subr.bf16.mxu0 0
        %2437 = vmatpush1.bf16.msra.mxu0 0
        %2438 = vmatprep.mubr.bf16.mxu0 0
        %2439 = vmatmul.mubr.bf16.gmra.mrb[0].mxu0 %v2395
        %v2440 = vpop.f32.mrb[0].mxu0
        %v2441 = vadd.f32 0.0, %v2440
        %v2442 = vpop.f32.mrb[0].mxu0
        %v2443 = vpop.f32.mrb[0].mxu0
        %v2444 = vadd.f32 0.0, %v2443
        %v2445 = vpop.f32.mrb[0].mxu0
        %2446 = vmatprep.mubr.bf16.mxu0 0
        %2447 = vmatmul.mubr.bf16.gmra.mrb[0].mxu0 %v2398
        %v2448 = vpop.f32.mrb[0].mxu0
        %v2449 = vadd.f32 0.0, %v2448
        %v2450 = vpop.f32.mrb[0].mxu0
        %v2451 = vpop.f32.mrb[0].mxu0
        %v2452 = vadd.f32 0.0, %v2451
        %v2453 = vpop.f32.mrb[0].mxu0
        %2454 = vmatprep.mubr.bf16.mxu0 0
        %2455 = vmatmul.mubr.bf16.gmra.mrb[0].mxu0 %v2401
        %v2456 = vpop.f32.mrb[0].mxu0
        %v2457 = vadd.f32 0.0, %v2456
        %v2458 = vpop.f32.mrb[0].mxu0
        %v2459 = vpop.f32.mrb[0].mxu0
        %v2460 = vadd.f32 0.0, %v2459
        %v2461 = vpop.f32.mrb[0].mxu0
        %2462 = vmatprep.mubr.bf16.mxu0 0
        %2463 = vmatmul.mubr.bf16.gmra.mrb[0].mxu0 %v2404
        %v2464 = vpop.f32.mrb[0].mxu0
        %v2465 = vadd.f32 0.0, %v2464
        %v2466 = vpop.f32.mrb[0].mxu0
        %v2467 = vpop.f32.mrb[0].mxu0
        %v2468 = vadd.f32 0.0, %v2467
        %v2469 = vpop.f32.mrb[0].mxu0
        %2470 = vdwg.mxu0
        %v2471 = vrcp.pop %v2356
        %v2472 = vrcp.pop %v2359
        %v2473 = vrcp.pop %v2362
        %v2474 = vrcp.pop %v2365
        %v2475 = vrcp.pop %v2368
        %v2476 = vrcp.pop %v2371
        %v2477 = vrcp.pop %v2374
        %v2478 = vrcp.pop %v2377
        %v2479 = vmul.f32 %v2441, %v2471
        %v2480 = vmul.f32 %v2444, %v2472
        %v2481 = vmul.f32 %v2449, %v2473
        %v2482 = vmul.f32 %v2452, %v2474
        %v2483 = vmul.f32 %v2457, %v2475
        %v2484 = vmul.f32 %v2460, %v2476
        %v2485 = vmul.f32 %v2465, %v2477
        %v2486 = vmul.f32 %v2468, %v2478
        %2495 = vrot.lane.b32.xlu0 %v1419, 32
        %v2496 = vpop.permute.xlu0 %2495
        %2497 = vrot.lane.b32.xlu0 %v1420, 32
        %v2498 = vpop.permute.xlu0 %2497
        %2499 = vrot.lane.b32.xlu0 %v1421, 32
        %v2500 = vpop.permute.xlu0 %2499
        %2501 = vrot.lane.b32.xlu0 %v1422, 32
        %v2502 = vpop.permute.xlu0 %2501
        %2503 = vrot.lane.b32.xlu0 %v1423, 32
        %v2504 = vpop.permute.xlu0 %2503
        %2505 = vrot.lane.b32.xlu0 %v1424, 32
        %v2506 = vpop.permute.xlu0 %2505
        %2507 = vrot.lane.b32.xlu0 %v1425, 32
        %v2508 = vpop.permute.xlu0 %2507
        %2509 = vrot.lane.b32.xlu0 %v1426, 32
        %v2510 = vpop.permute.xlu0 %2509
        %2527 = vrot.lane.b32.xlu0 %v1961, 64
        %v2528 = vpop.permute.xlu0 %2527
        %2529 = vrot.lane.b32.xlu0 %v1962, 64
        %v2530 = vpop.permute.xlu0 %2529
        %2531 = vrot.lane.b32.xlu0 %v1963, 64
        %v2532 = vpop.permute.xlu0 %2531
        %2533 = vrot.lane.b32.xlu0 %v1964, 64
        %v2534 = vpop.permute.xlu0 %2533
        %2535 = vrot.lane.b32.xlu0 %v1965, 64
        %v2536 = vpop.permute.xlu0 %2535
        %2537 = vrot.lane.b32.xlu0 %v1966, 64
        %v2538 = vpop.permute.xlu0 %2537
        %2539 = vrot.lane.b32.xlu0 %v1967, 64
        %v2540 = vpop.permute.xlu0 %2539
        %2541 = vrot.lane.b32.xlu0 %v1968, 64
        %v2542 = vpop.permute.xlu0 %2541
        %2559 = vrot.lane.b32.xlu0 %v2479, 96
        %v2560 = vpop.permute.xlu0 %2559
        %2561 = vrot.lane.b32.xlu0 %v2480, 96
        %v2562 = vpop.permute.xlu0 %2561
        %2563 = vrot.lane.b32.xlu0 %v2481, 96
        %v2564 = vpop.permute.xlu0 %2563
        %2565 = vrot.lane.b32.xlu0 %v2482, 96
        %v2566 = vpop.permute.xlu0 %2565
        %2567 = vrot.lane.b32.xlu0 %v2483, 96
        %v2568 = vpop.permute.xlu0 %2567
        %2569 = vrot.lane.b32.xlu0 %v2484, 96
        %v2570 = vpop.permute.xlu0 %2569
        %2571 = vrot.lane.b32.xlu0 %v2485, 96
        %v2572 = vpop.permute.xlu0 %2571
        %2573 = vrot.lane.b32.xlu0 %v2486, 96
        %v2574 = vpop.permute.xlu0 %2573
        %v2583 = vsel %vm585, %v861, %v2496
        %v2584 = vsel %vm585, %v862, %v2498
        %v2585 = vsel %vm585, %v863, %v2500
        %v2586 = vsel %vm585, %v864, %v2502
        %v2587 = vsel %vm585, %v865, %v2504
        %v2588 = vsel %vm585, %v866, %v2506
        %v2589 = vsel %vm585, %v867, %v2508
        %v2590 = vsel %vm585, %v868, %v2510
        %v2591 = vsel %vm675, %v2583, %v2528
        %v2592 = vsel %vm675, %v2584, %v2530
        %v2593 = vsel %vm675, %v2585, %v2532
        %v2594 = vsel %vm675, %v2586, %v2534
        %v2595 = vsel %vm675, %v2587, %v2536
        %v2596 = vsel %vm675, %v2588, %v2538
        %v2597 = vsel %vm675, %v2589, %v2540
        %v2598 = vsel %vm675, %v2590, %v2542
        %vm2599 = vcmask 785408
        %v2600 = vsel %vm2599, %v2591, %v2560
        %v2601 = vsel %vm2599, %v2592, %v2562
        %v2602 = vsel %vm2599, %v2593, %v2564
        %v2603 = vsel %vm2599, %v2594, %v2566
        %v2604 = vsel %vm2599, %v2595, %v2568
        %v2605 = vsel %vm2599, %v2596, %v2570
        %v2606 = vsel %vm2599, %v2597, %v2572
        %v2607 = vsel %vm2599, %v2598, %v2574
        %v2608 = vpack.c.bf16 %v2601, %v2600
        %v2609 = vpack.c.bf16 %v2603, %v2602
        %v2610 = vpack.c.bf16 %v2605, %v2604
        %v2611 = vpack.c.bf16 %v2607, %v2606
        %v2616 = vunpack.c.l.b16 %v2608
        %v2617 = vunpack.c.h.b16 %v2608
        %v2618 = vunpack.c.l.b16 %v2609
        %v2619 = vunpack.c.h.b16 %v2609
        %v2620 = vunpack.c.l.b16 %v2610
        %v2621 = vunpack.c.h.b16 %v2610
        %v2622 = vunpack.c.l.b16 %v2611
        %v2623 = vunpack.c.h.b16 %v2611
        %v2624 = vpack.c.b16 %v2616, %v2616
        %v2625 = vpack.c.b16 %v2617, %v2617
        %v2626 = vpack.c.b16 %v2618, %v2618
        %v2627 = vpack.c.b16 %v2619, %v2619
        %v2628 = vpack.c.b16 %v2620, %v2620
        %v2629 = vpack.c.b16 %v2621, %v2621
        %v2630 = vpack.c.b16 %v2622, %v2622
        %v2631 = vpack.c.b16 %v2623, %v2623
        %2640 = vst [vmem:[%s220] sm:$0xf] %v2624
        %2641 = vst [vmem:[%s220 + $0x4] sm:$0xf] %v2625
        %2642 = vst [vmem:[%s220 + $0x8] sm:$0xf] %v2626
        %2643 = vst [vmem:[%s220 + $0xc] sm:$0xf] %v2627
        %2644 = vst [vmem:[%s220 + $0x10] sm:$0xf] %v2628
        %2645 = vst [vmem:[%s220 + $0x14] sm:$0xf] %v2629
        %2646 = vst [vmem:[%s220 + $0x18] sm:$0xf] %v2630
        %2647 = vst [vmem:[%s220 + $0x1c] sm:$0xf] %v2631
        %s2648 = sand.u32 %s125, 1
        %s2649 = scalar_lea.sflag [#allocation3], %s2648
        %s2650 = sand.u32 %s125, 1
        %s2651 = smul.addr %s2650, 32
        %s2652 = scalar_lea.vmem [#allocation2], %s2651
        // Predicated region
        $region37: #{tpu_custom_call.1} parent=35 // pred_check
          %p2653 = pneg %p135
        $region38: #{tpu_custom_call.1} parent=35 // pred_check_branch
          %2655 = sbr.rel (%p2653) target = $region40
        $region39: #{tpu_custom_call.1} parent=35 // pred_region
          %s2657 = ssub.s32 512, 512
          %2658 = vsyncadd %s2649, %s2657
          %s2659 = smul.addr %s18, 8
          %s2660 = smul.addr %s2659, 64
          %s2661 = scalar_lea.hbm %s4, %s2660
          %s2662 = sshll.u32 %s2652, 4
          %s2663 = int_to_ptr.vmem [resolvable:$true] %s2662
          %2668 = dma.vmem_to_hbm [thread:$0]  %s2663, 512, %s2661, %s2649, 64, 64, 4
        $region40: #{tpu_custom_call.1} parent=35 // pred_fallthru
          _
      $region36: #{tpu_custom_call.1} parent=5 // pred_fallthru
        _
      %p2669 = scmp.le.s32.totalorder 2, %s13
      // Predicated region
      $region41: #{tpu_custom_call.1} parent=5 // pred_check
        %p2670 = pneg %p2669
      $region42: #{tpu_custom_call.1} parent=5 // pred_check_branch
        %2672 = sbr.rel (%p2670) target = $region44
      $region43: #{tpu_custom_call.1} parent=5 // pred_region
        %s2673 = ssub.s32 %s13, 2
        // Predicated region
        $region45: #{tpu_custom_call.1} parent=43 // pred_check
          %p2674 = pneg %p141
        $region46: #{tpu_custom_call.1} parent=43 // pred_check_branch
          %2676 = sbr.rel (%p2674) target = $region48
        $region47: #{tpu_custom_call.1} parent=43 // pred_region
          %s2677 = sand.u32 %s126, 1
          %s2678 = scalar_lea.sflag [#allocation3], %s2677
          %s2679 = sand.u32 %s126, 1
          %s2680 = smul.addr %s2679, 32
          %s2681 = scalar_lea.vmem [#allocation2], %s2680
          %2682 = dma.done %s2678, 512
        $region48: #{tpu_custom_call.1} parent=43 // pred_fallthru
          _
      $region44: #{tpu_custom_call.1} parent=5 // pred_fallthru
        _
    $region6: #{tpu_custom_call.1} parent=1 // loop_footer
      %s17 = sadd.s32 1, %s13
    $region7: #{tpu_custom_call.1} parent=1 // loop_footer_branch
      %12 = sbr.rel target = $region3
    $region8: #{tpu_custom_call.1} parent=1 // loop_exit
      _
    %2683 = vsyncpa [#allocation3], 1
    %s2684 = scalar_lea.sflag [#allocation3], 1
    %2685 = vsyncpa %s2684, 1

</llo_original>
